<compile_context>
chip_gen: v7x
topology: tpu7x:2x2x1
jax: 0.10.0
libtpu: 0.0.40
codegen_flags: <defaults>
</compile_context>

<pallas_src>
import functools

import jax
import jax.numpy as jnp
import numpy as np
from jax.experimental import pallas as pl
from jax.experimental.pallas import tpu as pltpu


def _round_up(x, m):
    return (x + m - 1) // m * m


# ----------------------------------------------------------------------------
# Pallas kernel: one (batch, row-block) grid step
# ----------------------------------------------------------------------------
def _dynconv_block_kernel(x_ref, w_ref, o_ref, patch_ref, *,
                          TH, W_out_pad, C_in, KH, KW):
    # x_ref     : (H_req, W_req, C_in)       padded image of current batch elem
    # w_ref     : (F, C_out_pad)             pre-aggregated per-batch weight
    # o_ref     : (TH*W_out_pad, C_out_pad)  output row block (lane-dense)
    # patch_ref : (TH, W_out_pad, F)         im2col patch scratch
    rb = pl.program_id(1)
    y0 = pl.multiple_of(rb * TH, TH)

    # ---- block-level im2col: KH*KW slab copies (no per-row fragment packing) ----
    # TODO(synk): for tiny C_in (3/4) the NHWC x tile is lane-padded in VMEM
    # (C_in of 128 lanes); a space-to-depth / (H, W*C_in) layout would remove
    # that inflation at the cost of a lane->sublane relayout of each slab.
    for ki in range(KH):
        for kj in range(KW):
            idx = ki * KW + kj
            patch_ref[:, :, idx * C_in:(idx + 1) * C_in] = (
                x_ref[pl.ds(y0 + ki, TH), pl.ds(kj, W_out_pad), :])

    # ---- one fat MXU matmul per row block: M = TH*W_out_pad -----------------
    # W_out_pad is a multiple of 16, so this reshape is a tile-aligned no-op.
    F = patch_ref.shape[-1]
    patch = patch_ref[...].reshape(TH * W_out_pad, F)
    acc = jnp.dot(patch, w_ref[...], preferred_element_type=jnp.float32)
    o_ref[...] = acc.astype(o_ref.dtype)


# ----------------------------------------------------------------------------
# Pallas wrapper: tiling, padding, VMEM budget
# ----------------------------------------------------------------------------
def dyn_conv2d_pallas(x_nhwc, agg_w, *, KH, KW, compute_dtype=jnp.bfloat16,
                      target_m=256, max_rows_per_block=64):
    """x_nhwc: (B, H_eff, W_eff, C_in) f32; agg_w: (B, F, C_out) f32, F = KH*KW*C_in.

    Returns (B, H_out, W_out, C_out) in compute_dtype.
    """
    B, H_eff, W_eff, C_in = x_nhwc.shape
    Bw, F, C_out = agg_w.shape
    assert Bw == B and F == KH * KW * C_in
    H_out = H_eff - KH + 1
    W_out = W_eff - KW + 1
    assert H_out > 0 and W_out > 0

    # Lane-dense output channels; sublane-tile aligned output width (bf16 tile=16).
    C_out_pad = _round_up(C_out, 128)
    W_out_pad = _round_up(W_out, 16)
    # Row-block height: aim the matmul M-dim at ~target_m rows (MXU-friendly).
    TH = max(1, min(max_rows_per_block, (target_m + W_out_pad - 1) // W_out_pad))
    TH = min(TH, H_out)
    H_out_pad = _round_up(H_out, TH)
    n_rb = H_out_pad // TH
    H_req = H_out_pad + KH - 1
    W_req = W_out_pad + KW - 1

    # Zero-pad image so padded output rows/cols never read out of bounds.
    x_p = jnp.pad(x_nhwc, ((0, 0), (0, H_req - H_eff), (0, W_req - W_eff), (0, 0)))
    x_p = x_p.astype(compute_dtype)
    # Zero-pad output channels of the aggregated weight; cast once to bf16.
    w_p = jnp.pad(agg_w, ((0, 0), (0, 0), (0, C_out_pad - C_out))).astype(compute_dtype)

    kernel = functools.partial(_dynconv_block_kernel, TH=TH, W_out_pad=W_out_pad,
                               C_in=C_in, KH=KH, KW=KW)

    # --- VMEM budget: double-buffered pipelined blocks + scratch, capped at HW cap ---
    def tile_bytes(shape, dtype):
        it = jnp.dtype(dtype).itemsize
        s = list(shape)
        s[-1] = _round_up(s[-1], 128)
        s[-2] = _round_up(s[-2], 8 * max(1, 4 // it))
        return int(np.prod(s)) * it

    est = 2 * (tile_bytes((H_req, W_req, C_in), compute_dtype)
               + tile_bytes((F, C_out_pad), compute_dtype)
               + tile_bytes((TH * W_out_pad, C_out_pad), compute_dtype))
    est += tile_bytes((TH, W_out_pad, F), compute_dtype)
    try:
        vmem_cap = int(pltpu.get_tpu_info().vmem_capacity_bytes)
    except Exception:
        vmem_cap = 64 << 20  # safe lower bound across generations (v7x per-TC)
    vmem_limit = int(min(vmem_cap, max(8 << 20, est + (4 << 20))))

    # TODO(synk): for v7x at production H/W, single-buffer the rb-invariant x /
    # weight specs (pipeline_mode=pl.Buffered(1)) or halo-tile x rows per block
    # to cut resident VMEM; not needed at these shapes.
    out = pl.pallas_call(
        kernel,
        out_shape=jax.ShapeDtypeStruct((B, H_out_pad * W_out_pad, C_out_pad),
                                       compute_dtype),
        grid=(B, n_rb),
        in_specs=[
            # full (padded) image of the current batch element (rb-invariant)
            pl.BlockSpec((None, H_req, W_req, C_in), lambda b, rb: (b, 0, 0, 0)),
            # pre-aggregated per-batch weight (rb-invariant)
            pl.BlockSpec((None, F, C_out_pad), lambda b, rb: (b, 0, 0)),
        ],
        out_specs=pl.BlockSpec((None, TH * W_out_pad, C_out_pad),
                               lambda b, rb: (b, rb, 0)),
        scratch_shapes=[pltpu.VMEM((TH, W_out_pad, F), compute_dtype)],
        compiler_params=pltpu.CompilerParams(
            dimension_semantics=("parallel", "parallel"),
            vmem_limit_bytes=vmem_limit),
    )(x_p, w_p)

    out = out.reshape(B, H_out_pad, W_out_pad, C_out_pad)
    return out[:, :H_out, :W_out, :C_out]


# ----------------------------------------------------------------------------
# Parameter construction (deterministic, synthetic init mirroring __init__ shapes)
# ----------------------------------------------------------------------------
def init_params(key, in_planes, out_planes, kernel_size, K, ratio):
    hidden = int(in_planes * ratio) + 1 if in_planes != 3 else K
    k1, k2, k3 = jax.random.split(key, 3)
    bound_w = (6.0 / (in_planes * kernel_size * kernel_size)) ** 0.5
    params = {
        # GPM2d.psa: Conv2d(in, hidden, 1, bias=False) -> ReLU ->
        #            Conv2d(hidden, K*out, 1, bias=True)
        "psa_w1": jax.random.normal(k1, (hidden, in_planes), jnp.float32)
                  * (2.0 / in_planes) ** 0.5,
        "psa_w2": jax.random.normal(k2, (K * out_planes, hidden), jnp.float32)
                  * (2.0 / hidden) ** 0.5,
        "psa_b2": jnp.zeros((K * out_planes,), jnp.float32),
        # DynConv2d.weight: (K, out, in//groups, k, k)
        "weight": jax.random.uniform(
            k3, (K, out_planes, in_planes, kernel_size, kernel_size),
            jnp.float32, minval=-bound_w, maxval=bound_w),
        # declared in __init__ but NOT used by the runnable forward path:
        "bias": jnp.zeros((K, out_planes), jnp.float32),
    }
    return params, hidden


# ----------------------------------------------------------------------------
# Forward pass (attention/aggregation is tiny f32 glue; conv hot path in Pallas)
# ----------------------------------------------------------------------------
def gpm2d_attention(params, x, *, K, out_planes, temperature):
    # x: (B, C_in, H, W) -> attn: (B, K, out_planes), softmax over K. All f32.
    B = x.shape[0]
    pooled = jnp.mean(x, axis=(2, 3))                      # AdaptiveAvgPool2d(1)
    h = jnp.maximum(pooled @ params["psa_w1"].T, 0.0)      # 1x1 conv (no bias) + ReLU
    logits = h @ params["psa_w2"].T + params["psa_b2"]     # 1x1 conv + bias
    logits = logits.reshape(B, K, out_planes)
    return jax.nn.softmax(logits / temperature, axis=1)


def dynconv2d2_forward(params, x, *, kernel_size, K, out_planes, temperature,
                       stride=1, padding=0, dilation=1, groups=1,
                       compute_dtype=jnp.bfloat16):
    # TODO(synk): only stride=1, dilation=1, groups=1 (module defaults); the
    # bias branch of the PyTorch forward references an undefined name and is dead.
    assert stride == 1 and dilation == 1 and groups == 1
    B, C_in, H, W = x.shape

    attn = gpm2d_attention(params, x, K=K, out_planes=out_planes,
                           temperature=temperature)             # (B, K, out)  f32

    # weight (K, out, in, kh, kw) -> im2col layout (K, kh*kw*in, out)
    w_im2col = jnp.transpose(params["weight"], (0, 3, 4, 2, 1)).reshape(
        K, kernel_size * kernel_size * C_in, out_planes)

    # K-way aggregation hoisted out of the kernel (exact f32 elementwise math):
    # removes the row-block sequential dependency (both grid axes 'parallel')
    # and shrinks per-batch weight DMA by ~K x.
    agg_w = jnp.sum(attn[:, :, None, :] * w_im2col[None, :, :, :], axis=1)  # (B,F,out)

    x_nhwc = jnp.transpose(x, (0, 2, 3, 1))                      # NCHW -> NHWC
    if padding:
        x_nhwc = jnp.pad(x_nhwc, ((0, 0), (padding, padding),
                                  (padding, padding), (0, 0)))

    out_nhwc = dyn_conv2d_pallas(x_nhwc, agg_w, KH=kernel_size, KW=kernel_size,
                                 compute_dtype=compute_dtype)
    # Kernel emits bf16 (accuracy already bf16-operand-limited); cast back on the
    # NHWC->NCHW transpose the module interface requires anyway.
    return jnp.transpose(out_nhwc, (0, 3, 1, 2)).astype(x.dtype)


# ----------------------------------------------------------------------------
# Pure-JAX f32 reference (true module semantics) for correctness check
# ----------------------------------------------------------------------------
def reference_forward(params, x, *, kernel_size, K, out_planes, temperature):
    attn = gpm2d_attention(params, x, K=K, out_planes=out_planes,
                           temperature=temperature)
    agg_w = jnp.einsum("bko,koihw->boihw", attn, params["weight"])
    outs = []
    for b in range(x.shape[0]):
        outs.append(jax.lax.conv_general_dilated(
            x[b:b + 1], agg_w[b], window_strides=(1, 1), padding="VALID",
            dimension_numbers=("NCHW", "OIHW", "NCHW")))
    return jnp.concatenate(outs, axis=0)


if __name__ == "__main__":
    B, C_in, H, W = 2, 4, 16, 16
    C_out, ksize, K = 8, 3, 4
    temperature = 0.5

    key = jax.random.PRNGKey(0)
    kp, kx = jax.random.split(key)
    params, _ = init_params(kp, C_in, C_out, ksize, K, ratio=0.25)
    x = jax.random.normal(kx, (B, C_in, H, W), jnp.float32)

    fwd = jax.jit(functools.partial(dynconv2d2_forward, kernel_size=ksize, K=K,
                                    out_planes=C_out, temperature=temperature))
    out = jax.block_until_ready(fwd(params, x))
    assert out.shape == (B, C_out, H - ksize + 1, W - ksize + 1), out.shape

    ref = jax.block_until_ready(
        reference_forward(params, x, kernel_size=ksize, K=K,
                          out_planes=C_out, temperature=temperature))
    # Kernel uses bf16 MXU operands and bf16 output (f32 accumulation; attention
    # and weight aggregation in f32), so compare with bf16-appropriate tolerances.
    np.testing.assert_allclose(np.asarray(out), np.asarray(ref),
                               rtol=3e-2, atol=3e-2)
    print("KERNEL_OK")
</pallas_src>

<mosaic_0001>
module attributes {stable_mosaic.version = 11 : i64} {
  func.func @_dynconv_block_kernel(%arg0: i32, %arg1: i32, %arg2: memref<1x16x18x4xbf16, #tpu.memory_space<vmem>>, %arg3: memref<1x36x128xbf16, #tpu.memory_space<vmem>>, %arg4: memref<1x224x128xbf16, #tpu.memory_space<vmem>>, %arg5: memref<14x16x36xbf16, #tpu.memory_space<vmem>>) attributes {dimension_semantics = [#tpu.dimension_semantics<parallel>, #tpu.dimension_semantics<parallel>], iteration_bounds = array<i64: 2, 1>, scalar_prefetch = 0 : i64, scratch_operands = 1 : i64, tpu.core_type = #tpu.core_type<tc>, window_params = [{transform_indices = @transform_0, window_bounds = array<i64: 1, 16, 18, 4>}, {transform_indices = @transform_1, window_bounds = array<i64: 1, 36, 128>}, {transform_indices = @transform_2, window_bounds = array<i64: 1, 224, 128>}]} {
    %c14_i32 = arith.constant 14 : i32
    %0 = arith.muli %arg1, %c14_i32 : i32
    %1 = tpu.assume_multiple %0, 14 : i32
    %c0_i32 = arith.constant 0 : i32
    %2 = arith.addi %1, %c0_i32 : i32
    %c0 = arith.constant 0 : index
    %3 = arith.index_cast %2 : i32 to index
    %c0_0 = arith.constant 0 : index
    %c0_1 = arith.constant 0 : index
    %4 = vector.load %arg2[%c0, %3, %c0_0, %c0_1] : memref<1x16x18x4xbf16, #tpu.memory_space<vmem>>, vector<1x14x16x4xbf16>
    %5 = vector.shape_cast %4 : vector<1x14x16x4xbf16> to vector<14x16x4xbf16>
    %c0_2 = arith.constant 0 : index
    %c0_3 = arith.constant 0 : index
    %c0_4 = arith.constant 0 : index
    %6 = vector.load %arg5[%c0_2, %c0_3, %c0_4] : memref<14x16x36xbf16, #tpu.memory_space<vmem>>, vector<14x16x4xbf16>
    tpu.vector_store %arg5[%c0_2, %c0_3, %c0_4], %5 {strides = array<i32>} : memref<14x16x36xbf16, #tpu.memory_space<vmem>>, vector<14x16x4xbf16>,
    %c0_i32_5 = arith.constant 0 : i32
    %7 = arith.addi %1, %c0_i32_5 : i32
    %c0_6 = arith.constant 0 : index
    %8 = arith.index_cast %7 : i32 to index
    %c1 = arith.constant 1 : index
    %c0_7 = arith.constant 0 : index
    %9 = vector.load %arg2[%c0_6, %8, %c1, %c0_7] : memref<1x16x18x4xbf16, #tpu.memory_space<vmem>>, vector<1x14x16x4xbf16>
    %10 = vector.shape_cast %9 : vector<1x14x16x4xbf16> to vector<14x16x4xbf16>
    %c0_8 = arith.constant 0 : index
    %c0_9 = arith.constant 0 : index
    %c4 = arith.constant 4 : index
    %11 = vector.load %arg5[%c0_8, %c0_9, %c4] : memref<14x16x36xbf16, #tpu.memory_space<vmem>>, vector<14x16x4xbf16>
    tpu.vector_store %arg5[%c0_8, %c0_9, %c4], %10 {strides = array<i32>} : memref<14x16x36xbf16, #tpu.memory_space<vmem>>, vector<14x16x4xbf16>,
    %c0_i32_10 = arith.constant 0 : i32
    %12 = arith.addi %1, %c0_i32_10 : i32
    %c0_11 = arith.constant 0 : index
    %13 = arith.index_cast %12 : i32 to index
    %c2 = arith.constant 2 : index
    %c0_12 = arith.constant 0 : index
    %14 = vector.load %arg2[%c0_11, %13, %c2, %c0_12] : memref<1x16x18x4xbf16, #tpu.memory_space<vmem>>, vector<1x14x16x4xbf16>
    %15 = vector.shape_cast %14 : vector<1x14x16x4xbf16> to vector<14x16x4xbf16>
    %c0_13 = arith.constant 0 : index
    %c0_14 = arith.constant 0 : index
    %c8 = arith.constant 8 : index
    %16 = vector.load %arg5[%c0_13, %c0_14, %c8] : memref<14x16x36xbf16, #tpu.memory_space<vmem>>, vector<14x16x4xbf16>
    tpu.vector_store %arg5[%c0_13, %c0_14, %c8], %15 {strides = array<i32>} : memref<14x16x36xbf16, #tpu.memory_space<vmem>>, vector<14x16x4xbf16>,
    %c1_i32 = arith.constant 1 : i32
    %17 = arith.addi %1, %c1_i32 : i32
    %c0_15 = arith.constant 0 : index
    %18 = arith.index_cast %17 : i32 to index
    %c0_16 = arith.constant 0 : index
    %c0_17 = arith.constant 0 : index
    %19 = vector.load %arg2[%c0_15, %18, %c0_16, %c0_17] : memref<1x16x18x4xbf16, #tpu.memory_space<vmem>>, vector<1x14x16x4xbf16>
    %20 = vector.shape_cast %19 : vector<1x14x16x4xbf16> to vector<14x16x4xbf16>
    %c0_18 = arith.constant 0 : index
    %c0_19 = arith.constant 0 : index
    %c12 = arith.constant 12 : index
    %21 = vector.load %arg5[%c0_18, %c0_19, %c12] : memref<14x16x36xbf16, #tpu.memory_space<vmem>>, vector<14x16x4xbf16>
    tpu.vector_store %arg5[%c0_18, %c0_19, %c12], %20 {strides = array<i32>} : memref<14x16x36xbf16, #tpu.memory_space<vmem>>, vector<14x16x4xbf16>,
    %c1_i32_20 = arith.constant 1 : i32
    %22 = arith.addi %1, %c1_i32_20 : i32
    %c0_21 = arith.constant 0 : index
    %23 = arith.index_cast %22 : i32 to index
    %c1_22 = arith.constant 1 : index
    %c0_23 = arith.constant 0 : index
    %24 = vector.load %arg2[%c0_21, %23, %c1_22, %c0_23] : memref<1x16x18x4xbf16, #tpu.memory_space<vmem>>, vector<1x14x16x4xbf16>
    %25 = vector.shape_cast %24 : vector<1x14x16x4xbf16> to vector<14x16x4xbf16>
    %c0_24 = arith.constant 0 : index
    %c0_25 = arith.constant 0 : index
    %c16 = arith.constant 16 : index
    %26 = vector.load %arg5[%c0_24, %c0_25, %c16] : memref<14x16x36xbf16, #tpu.memory_space<vmem>>, vector<14x16x4xbf16>
    tpu.vector_store %arg5[%c0_24, %c0_25, %c16], %25 {strides = array<i32>} : memref<14x16x36xbf16, #tpu.memory_space<vmem>>, vector<14x16x4xbf16>,
    %c1_i32_26 = arith.constant 1 : i32
    %27 = arith.addi %1, %c1_i32_26 : i32
    %c0_27 = arith.constant 0 : index
    %28 = arith.index_cast %27 : i32 to index
    %c2_28 = arith.constant 2 : index
    %c0_29 = arith.constant 0 : index
    %29 = vector.load %arg2[%c0_27, %28, %c2_28, %c0_29] : memref<1x16x18x4xbf16, #tpu.memory_space<vmem>>, vector<1x14x16x4xbf16>
    %30 = vector.shape_cast %29 : vector<1x14x16x4xbf16> to vector<14x16x4xbf16>
    %c0_30 = arith.constant 0 : index
    %c0_31 = arith.constant 0 : index
    %c20 = arith.constant 20 : index
    %31 = vector.load %arg5[%c0_30, %c0_31, %c20] : memref<14x16x36xbf16, #tpu.memory_space<vmem>>, vector<14x16x4xbf16>
    tpu.vector_store %arg5[%c0_30, %c0_31, %c20], %30 {strides = array<i32>} : memref<14x16x36xbf16, #tpu.memory_space<vmem>>, vector<14x16x4xbf16>,
    %c2_i32 = arith.constant 2 : i32
    %32 = arith.addi %1, %c2_i32 : i32
    %c0_32 = arith.constant 0 : index
    %33 = arith.index_cast %32 : i32 to index
    %c0_33 = arith.constant 0 : index
    %c0_34 = arith.constant 0 : index
    %34 = vector.load %arg2[%c0_32, %33, %c0_33, %c0_34] : memref<1x16x18x4xbf16, #tpu.memory_space<vmem>>, vector<1x14x16x4xbf16>
    %35 = vector.shape_cast %34 : vector<1x14x16x4xbf16> to vector<14x16x4xbf16>
    %c0_35 = arith.constant 0 : index
    %c0_36 = arith.constant 0 : index
    %c24 = arith.constant 24 : index
    %36 = vector.load %arg5[%c0_35, %c0_36, %c24] : memref<14x16x36xbf16, #tpu.memory_space<vmem>>, vector<14x16x4xbf16>
    tpu.vector_store %arg5[%c0_35, %c0_36, %c24], %35 {strides = array<i32>} : memref<14x16x36xbf16, #tpu.memory_space<vmem>>, vector<14x16x4xbf16>,
    %c2_i32_37 = arith.constant 2 : i32
    %37 = arith.addi %1, %c2_i32_37 : i32
    %c0_38 = arith.constant 0 : index
    %38 = arith.index_cast %37 : i32 to index
    %c1_39 = arith.constant 1 : index
    %c0_40 = arith.constant 0 : index
    %39 = vector.load %arg2[%c0_38, %38, %c1_39, %c0_40] : memref<1x16x18x4xbf16, #tpu.memory_space<vmem>>, vector<1x14x16x4xbf16>
    %40 = vector.shape_cast %39 : vector<1x14x16x4xbf16> to vector<14x16x4xbf16>
    %c0_41 = arith.constant 0 : index
    %c0_42 = arith.constant 0 : index
    %c28 = arith.constant 28 : index
    %41 = vector.load %arg5[%c0_41, %c0_42, %c28] : memref<14x16x36xbf16, #tpu.memory_space<vmem>>, vector<14x16x4xbf16>
    tpu.vector_store %arg5[%c0_41, %c0_42, %c28], %40 {strides = array<i32>} : memref<14x16x36xbf16, #tpu.memory_space<vmem>>, vector<14x16x4xbf16>,
    %c2_i32_43 = arith.constant 2 : i32
    %42 = arith.addi %1, %c2_i32_43 : i32
    %c0_44 = arith.constant 0 : index
    %43 = arith.index_cast %42 : i32 to index
    %c2_45 = arith.constant 2 : index
    %c0_46 = arith.constant 0 : index
    %44 = vector.load %arg2[%c0_44, %43, %c2_45, %c0_46] : memref<1x16x18x4xbf16, #tpu.memory_space<vmem>>, vector<1x14x16x4xbf16>
    %45 = vector.shape_cast %44 : vector<1x14x16x4xbf16> to vector<14x16x4xbf16>
    %c0_47 = arith.constant 0 : index
    %c0_48 = arith.constant 0 : index
    %c32 = arith.constant 32 : index
    %46 = vector.load %arg5[%c0_47, %c0_48, %c32] : memref<14x16x36xbf16, #tpu.memory_space<vmem>>, vector<14x16x4xbf16>
    tpu.vector_store %arg5[%c0_47, %c0_48, %c32], %45 {strides = array<i32>} : memref<14x16x36xbf16, #tpu.memory_space<vmem>>, vector<14x16x4xbf16>,
    %c0_49 = arith.constant 0 : index
    %c0_50 = arith.constant 0 : index
    %c0_51 = arith.constant 0 : index
    %47 = vector.load %arg5[%c0_49, %c0_50, %c0_51] : memref<14x16x36xbf16, #tpu.memory_space<vmem>>, vector<14x16x36xbf16>
    %48 = vector.shape_cast %47 : vector<14x16x36xbf16> to vector<224x36xbf16>
    %c0_52 = arith.constant 0 : index
    %c0_53 = arith.constant 0 : index
    %c0_54 = arith.constant 0 : index
    %49 = vector.load %arg3[%c0_52, %c0_53, %c0_54] : memref<1x36x128xbf16, #tpu.memory_space<vmem>>, vector<1x36x128xbf16>
    %50 = vector.shape_cast %49 : vector<1x36x128xbf16> to vector<36x128xbf16>
    %cst = arith.constant dense<0.000000e+00> : vector<224x128xf32>
    %51 = tpu.matmul %48, %50, %cst {dimension_numbers = #tpu.dot_dimension_numbers<[1], [0], [0], [1], [0, 0, 1, 1], [], []>} : vector<224x36xbf16>, vector<36x128xbf16>, vector<224x128xf32> -> vector<224x128xf32>
    %52 = arith.truncf %51 : vector<224x128xf32> to vector<224x128xbf16>
    %c0_55 = arith.constant 0 : index
    %c0_56 = arith.constant 0 : index
    %c0_57 = arith.constant 0 : index
    %53 = vector.load %arg4[%c0_55, %c0_56, %c0_57] : memref<1x224x128xbf16, #tpu.memory_space<vmem>>, vector<1x224x128xbf16>
    %54 = vector.shape_cast %53 : vector<1x224x128xbf16> to vector<224x128xbf16>
    %55 = vector.shape_cast %52 : vector<224x128xbf16> to vector<1x224x128xbf16>
    tpu.vector_store %arg4[%c0_55, %c0_56, %c0_57], %55 {strides = array<i32>} : memref<1x224x128xbf16, #tpu.memory_space<vmem>>, vector<1x224x128xbf16>,
    return
  }
  func.func @transform_0(%arg0: i32, %arg1: i32) -> (i32, i32, i32, i32) {
    %c0_i32 = arith.constant 0 : i32
    %c0_i32_0 = arith.constant 0 : i32
    %c0_i32_1 = arith.constant 0 : i32
    %c0_i32_2 = arith.constant 0 : i32
    return %arg0, %c0_i32, %c0_i32_0, %c0_i32_1 : i32, i32, i32, i32
  }
  func.func @transform_1(%arg0: i32, %arg1: i32) -> (i32, i32, i32) {
    %c0_i32 = arith.constant 0 : i32
    %c0_i32_0 = arith.constant 0 : i32
    %c0_i32_1 = arith.constant 0 : i32
    return %arg0, %c0_i32, %c0_i32_0 : i32, i32, i32
  }
  func.func @transform_2(%arg0: i32, %arg1: i32) -> (i32, i32, i32) {
    %c0_i32 = arith.constant 0 : i32
    %c0_i32_0 = arith.constant 0 : i32
    return %arg0, %arg1, %c0_i32 : i32, i32, i32
  }
}

</mosaic_0001>

<llo_original>
// kernel: dynconv2d2_forward.1
$region0: #{dynconv2d2_forward.1}
  #allocation0 [shape = 'u32[]', space=smem, size = 0x4, offset = 0x4, fixed_abs, tag = 'smem constant byte address 0x4 - core index']
  #allocation1 [shape = 'u32[144,128]{1,0:T(1,128)}', space=vmem, size = 0x12000, scoped, tag = 'internal scratch']
  #allocation2 [shape = 'bf16[14,16,36]{2,1,0:T(16,128)(2,1)}', space=vmem, size = 0xe000, scoped, tag = 'scratch operand']
  %s0 = inlined_call_operand.vmem [shape: bf16[2,16,18,4], index: 0, kind: input, shape index: {}]
  %s1 = inlined_call_operand.vmem [shape: bf16[2,36,128], index: 1, kind: input, shape index: {}]
  %s2 = inlined_call_operand.vmem [shape: bf16[2,224,128], index: 2, kind: output, shape index: {}]
  %s3 = sld [smem:[#allocation0]]
  $region41: #{dynconv2d2_forward.1} parent=0
    _
  %s5 = ssub.s32 1, %s3
  %s6 = scalar_select 0, %s5, %s3
  loop: start=0, step=1, limit=4
  $region2: #{dynconv2d2_forward.1} parent=0 // loop_pre_header
    _
  $region3: #{dynconv2d2_forward.1} parent=0 // loop_header
    %s8 = sphi 0, %s12
    %p9 = scmp.ge.s32.totalorder %s8, 4
    %s15 = sphi 0, %s27
    %s16 = sphi 0, %s23
    %s17 = sphi 0, %s15
    %s18 = sphi 0, %s16
    %s19 = sphi 0, %s17
    %s20 = sphi 0, %s18
    %s30 = sphi 0, %s32
    %s33 = sphi 0, %s30
    %s34 = sphi 0, %s33
    %s50 = sphi 0, %s34
    %s56 = sphi 0, %s58
    %s59 = sphi 0, %s56
    %s60 = sphi 0, %s59
    %s76 = sphi 0, %s60
    %s84 = sphi 0, %s86
    %s87 = sphi 0, %s84
    %s88 = sphi 0, %s87
    %s104 = sphi 0, %s88
  $region4: #{dynconv2d2_forward.1} parent=0 // loop_header_branch
    %11 = sbr.rel (%p9) target = $region8
  $region5: #{dynconv2d2_forward.1} parent=0 // loop_body
    %s13 = ssub.s32 %s8, 1
    %s14 = ssub.s32 %s8, 2
    %s21 = sadd.s32 1, %s16
    %p22 = scmp.ge.s32.totalorder %s21, 1
    %s23 = scalar_select %p22, 0, %s21
    %s24 = sadd.s32 1, %s15
    %s25 = scalar_select %p22, %s24, %s15
    %p26 = scmp.ge.s32.totalorder %s25, 2
    %s27 = scalar_select %p26, 0, %s25
    %s28 = ssub.s32 %s15, %s27
    %p29 = scmp.eq.s32.totalorder %s28, 0
    %s31 = sadd.s32 %s30, 1
    %s32 = scalar_select %p29, %s30, %s31
    %p35 = pneg %p29
    %p36 = scmp.eq.s32.totalorder %s8, 1
    %p37 = por %p35, %p36
    %p38 = scmp.ne.s32.totalorder %s30, %s33
    %p39 = scmp.eq.s32.totalorder %s8, 0
    %p40 = por %p38, %p39
    %p41 = scmp.ne.s32.totalorder %s30, %s33
    %p42 = scmp.eq.s32.totalorder %s13, 1
    %p43 = por %p41, %p42
    %p44 = scmp.ne.s32.totalorder %s33, %s34
    %p45 = scmp.eq.s32.totalorder %s13, 0
    %p46 = por %p44, %p45
    %p47 = scmp.ne.s32.totalorder %s33, %s34
    %p48 = scmp.eq.s32.totalorder %s14, 1
    %p49 = por %p47, %p48
    %p51 = scmp.ne.s32.totalorder %s34, %s50
    %p52 = scmp.eq.s32.totalorder %s14, 0
    %p53 = por %p51, %p52
    %s54 = ssub.s32 %s15, %s27
    %p55 = scmp.eq.s32.totalorder %s54, 0
    %s57 = sadd.s32 %s56, 1
    %s58 = scalar_select %p55, %s56, %s57
    %p61 = pneg %p55
    %p62 = scmp.eq.s32.totalorder %s8, 1
    %p63 = por %p61, %p62
    %p64 = scmp.ne.s32.totalorder %s56, %s59
    %p65 = scmp.eq.s32.totalorder %s8, 0
    %p66 = por %p64, %p65
    %p67 = scmp.ne.s32.totalorder %s56, %s59
    %p68 = scmp.eq.s32.totalorder %s13, 1
    %p69 = por %p67, %p68
    %p70 = scmp.ne.s32.totalorder %s59, %s60
    %p71 = scmp.eq.s32.totalorder %s13, 0
    %p72 = por %p70, %p71
    %p73 = scmp.ne.s32.totalorder %s59, %s60
    %p74 = scmp.eq.s32.totalorder %s14, 1
    %p75 = por %p73, %p74
    %p77 = scmp.ne.s32.totalorder %s60, %s76
    %p78 = scmp.eq.s32.totalorder %s14, 0
    %p79 = por %p77, %p78
    %s80 = ssub.s32 %s15, %s27
    %s81 = ssub.s32 %s16, %s23
    %s82 = sor.u32 %s80, %s81
    %p83 = scmp.eq.s32.totalorder %s82, 0
    %s85 = sadd.s32 %s84, 1
    %s86 = scalar_select %p83, %s84, %s85
    %p89 = pneg %p83
    %p90 = scmp.eq.s32.totalorder %s8, 1
    %p91 = por %p89, %p90
    %p92 = scmp.ne.s32.totalorder %s84, %s87
    %p93 = scmp.eq.s32.totalorder %s8, 0
    %p94 = por %p92, %p93
    %p95 = scmp.ne.s32.totalorder %s84, %s87
    %p96 = scmp.eq.s32.totalorder %s13, 1
    %p97 = por %p95, %p96
    %p98 = scmp.ne.s32.totalorder %s87, %s88
    %p99 = scmp.eq.s32.totalorder %s13, 0
    %p100 = por %p98, %p99
    %p101 = scmp.ne.s32.totalorder %s87, %s88
    %p102 = scmp.eq.s32.totalorder %s14, 1
    %p103 = por %p101, %p102
    %p105 = scmp.ne.s32.totalorder %s88, %s104
    %p106 = scmp.eq.s32.totalorder %s14, 0
    %p107 = por %p105, %p106
    %p108 = scmp.le.s32.totalorder 1, %s8
    %p109 = scmp.lt.s32.totalorder %s8, 3
    %p110 = pnand %p108, %p109
    %p111 = pneg %p110
    // Predicated region
    $region9: #{dynconv2d2_forward.1} parent=5 // pred_check
      _
    $region10: #{dynconv2d2_forward.1} parent=5 // pred_check_branch
      %113 = sbr.rel (%p110) target = $region12
    $region11: #{dynconv2d2_forward.1} parent=5 // pred_region
      %s114 = ssub.s32 %s8, 1
    $region12: #{dynconv2d2_forward.1} parent=5 // pred_fallthru
      _
    %p115 = scmp.lt.s32.totalorder %s8, 2
    // Predicated region
    $region13: #{dynconv2d2_forward.1} parent=5 // pred_check
      %p116 = pneg %p115
    $region14: #{dynconv2d2_forward.1} parent=5 // pred_check_branch
      %118 = sbr.rel (%p116) target = $region16
    $region15: #{dynconv2d2_forward.1} parent=5 // pred_region
      // Predicated region
      $region17: #{dynconv2d2_forward.1} parent=15 // pred_check
        %p119 = pneg %p40
      $region18: #{dynconv2d2_forward.1} parent=15 // pred_check_branch
        %121 = sbr.rel (%p119) target = $region20
      $region19: #{dynconv2d2_forward.1} parent=15 // pred_region
        %p122 = scmp.lt.s32.totalorder %s15, 1
        %s123 = scalar_select %p122, %s15, 1
        %s124 = smul.addr %s123, 48
        %s125 = smul.addr %s124, 4
        %s126 = scalar_lea.vmem %s0, %s125
      $region20: #{dynconv2d2_forward.1} parent=15 // pred_fallthru
        _
      // Predicated region
      $region21: #{dynconv2d2_forward.1} parent=15 // pred_check
        %p127 = pneg %p66
      $region22: #{dynconv2d2_forward.1} parent=15 // pred_check_branch
        %129 = sbr.rel (%p127) target = $region24
      $region23: #{dynconv2d2_forward.1} parent=15 // pred_region
        %p130 = scmp.lt.s32.totalorder %s15, 1
        %s131 = scalar_select %p130, %s15, 1
        %s132 = smul.addr %s131, 5
        %s133 = smul.addr %s132, 4
        %s134 = scalar_lea.vmem %s1, %s133
      $region24: #{dynconv2d2_forward.1} parent=15 // pred_fallthru
        _
    $region16: #{dynconv2d2_forward.1} parent=5 // pred_fallthru
      _
    %p135 = scmp.le.s32.totalorder 1, %s8
    %p136 = scmp.lt.s32.totalorder %s8, 3
    %p137 = pnand %p135, %p136
    %p138 = pneg %p137
    // Predicated region
    $region25: #{dynconv2d2_forward.1} parent=5 // pred_check
      _
    $region26: #{dynconv2d2_forward.1} parent=5 // pred_check_branch
      %140 = sbr.rel (%p137) target = $region28
    $region27: #{dynconv2d2_forward.1} parent=5 // pred_region
      %s141 = ssub.s32 %s8, 1
      %p142 = scmp.lt.s32.totalorder %s17, 1
      %s143 = scalar_select %p142, %s17, 1
      %s144 = smul.addr %s143, 48
      %s145 = smul.addr %s144, 4
      %s146 = scalar_lea.vmem %s0, %s145
      %p147 = pneg %p46
      %p148 = pneg %p43
      %p149 = scmp.lt.s32.totalorder %s17, 1
      %s150 = scalar_select %p149, %s17, 1
      %s151 = smul.addr %s150, 5
      %s152 = smul.addr %s151, 4
      %s153 = scalar_lea.vmem %s1, %s152
      %p154 = pneg %p72
      %p155 = pneg %p69
      %p156 = pneg %p100
      %p157 = pneg %p97
      %s158 = smul.u32 28, %s18
      %p159 = scmp.lt.s32.totalorder %s17, 1
      %s160 = scalar_select %p159, %s17, 1
      %p161 = scmp.lt.s32.totalorder %s158, 27
      %s162 = scalar_select %p161, %s158, 27
      %s163 = smul.addr %s160, 28
      %s164 = sadd.s32 %s162, %s163
      %s165 = smul.addr %s164, 4
      %s166 = scalar_lea.vmem %s2, %s165
      %p167 = scmp.lt.s32.totalorder %s17, 1
      %s168 = scalar_select %p167, %s17, 1
      %s169 = smul.addr %s168, 48
      %s170 = smul.addr %s169, 4
      %s171 = scalar_lea.vmem %s0, %s170
      %p172 = scmp.lt.s32.totalorder %s17, 1
      %s173 = scalar_select %p172, %s17, 1
      %s174 = smul.addr %s173, 5
      %s175 = smul.addr %s174, 4
      %s176 = scalar_lea.vmem %s1, %s175
      %s177 = smul.u32 28, %s18
      %p178 = scmp.lt.s32.totalorder %s17, 1
      %s179 = scalar_select %p178, %s17, 1
      %p180 = scmp.lt.s32.totalorder %s177, 27
      %s181 = scalar_select %p180, %s177, 27
      %s182 = smul.addr %s179, 28
      %s183 = sadd.s32 %s181, %s182
      %s184 = smul.addr %s183, 4
      %s185 = scalar_lea.vmem %s2, %s184
      %s186 = smul.u32 28, %s18
      %s188 = smul.u32 %s18, 14
      %s189 = smul.u32 %s188, 3
      %s190 = smul.addr %s189, 4
      %s191 = scalar_lea.vmem %s171, %s190
      %v192 = vld [vmem:[%s191] sm:$0xf]
      %v193 = vld [vmem:[%s191 + $0x4] sm:$0xf]
      %v194 = vld [vmem:[%s191 + $0xc] sm:$0xf]
      %v195 = vld [vmem:[%s191 + $0x10] sm:$0xf]
      %v196 = vld [vmem:[%s191 + $0x18] sm:$0xf]
      %v197 = vld [vmem:[%s191 + $0x1c] sm:$0xf]
      %v198 = vld [vmem:[%s191 + $0x24] sm:$0xf]
      %v199 = vld [vmem:[%s191 + $0x28] sm:$0xf]
      %v200 = vld [vmem:[%s191 + $0x30] sm:$0xf]
      %v201 = vld [vmem:[%s191 + $0x34] sm:$0xf]
      %v202 = vld [vmem:[%s191 + $0x3c] sm:$0xf]
      %v203 = vld [vmem:[%s191 + $0x40] sm:$0xf]
      %v204 = vld [vmem:[%s191 + $0x48] sm:$0xf]
      %v205 = vld [vmem:[%s191 + $0x4c] sm:$0xf]
      %v206 = vld [vmem:[%s191 + $0x54] sm:$0xf]
      %v207 = vld [vmem:[%s191 + $0x58] sm:$0xf]
      %v208 = vld [vmem:[%s191 + $0x60] sm:$0xf]
      %v209 = vld [vmem:[%s191 + $0x64] sm:$0xf]
      %v210 = vld [vmem:[%s191 + $0x6c] sm:$0xf]
      %v211 = vld [vmem:[%s191 + $0x70] sm:$0xf]
      %v212 = vld [vmem:[%s191 + $0x78] sm:$0xf]
      %v213 = vld [vmem:[%s191 + $0x7c] sm:$0xf]
      %v214 = vld [vmem:[%s191 + $0x84] sm:$0xf]
      %v215 = vld [vmem:[%s191 + $0x88] sm:$0xf]
      %v216 = vld [vmem:[%s191 + $0x90] sm:$0xf]
      %v217 = vld [vmem:[%s191 + $0x94] sm:$0xf]
      %v218 = vld [vmem:[%s191 + $0x9c] sm:$0xf]
      %v219 = vld [vmem:[%s191 + $0xa0] sm:$0xf]
      %v248 = vunpack.c.l.b16 %v192
      %v249 = vunpack.c.l.b16 %v193
      %v250 = vunpack.c.l.b16 %v194
      %v251 = vunpack.c.l.b16 %v195
      %v252 = vunpack.c.l.b16 %v196
      %v253 = vunpack.c.l.b16 %v197
      %v254 = vunpack.c.l.b16 %v198
      %v255 = vunpack.c.l.b16 %v199
      %v256 = vunpack.c.l.b16 %v200
      %v257 = vunpack.c.l.b16 %v201
      %v258 = vunpack.c.l.b16 %v202
      %v259 = vunpack.c.l.b16 %v203
      %v260 = vunpack.c.l.b16 %v204
      %v261 = vunpack.c.l.b16 %v205
      %v262 = vunpack.c.l.b16 %v206
      %v263 = vunpack.c.l.b16 %v207
      %v264 = vunpack.c.l.b16 %v208
      %v265 = vunpack.c.l.b16 %v209
      %v266 = vunpack.c.l.b16 %v210
      %v267 = vunpack.c.l.b16 %v211
      %v268 = vunpack.c.l.b16 %v212
      %v269 = vunpack.c.l.b16 %v213
      %v270 = vunpack.c.l.b16 %v214
      %v271 = vunpack.c.l.b16 %v215
      %v272 = vunpack.c.l.b16 %v216
      %v273 = vunpack.c.l.b16 %v217
      %v274 = vunpack.c.l.b16 %v218
      %v275 = vunpack.c.l.b16 %v219
      %v276 = vpack.c.b16 %v249, %v248
      %v277 = vpack.c.b16 %v251, %v250
      %v278 = vpack.c.b16 %v253, %v252
      %v279 = vpack.c.b16 %v255, %v254
      %v280 = vpack.c.b16 %v257, %v256
      %v281 = vpack.c.b16 %v259, %v258
      %v282 = vpack.c.b16 %v261, %v260
      %v283 = vpack.c.b16 %v263, %v262
      %v284 = vpack.c.b16 %v265, %v264
      %v285 = vpack.c.b16 %v267, %v266
      %v286 = vpack.c.b16 %v269, %v268
      %v287 = vpack.c.b16 %v271, %v270
      %v288 = vpack.c.b16 %v273, %v272
      %v289 = vpack.c.b16 %v275, %v274
      %vm304 = vcmask 31744
      %305 = vst.msk [vmem:[#allocation2] sm:$0xff] %vm304, %v276
      %306 = vst.msk [vmem:[#allocation2 + $0x8] sm:$0xff] %vm304, %v277
      %307 = vst.msk [vmem:[#allocation2 + $0x10] sm:$0xff] %vm304, %v278
      %308 = vst.msk [vmem:[#allocation2 + $0x18] sm:$0xff] %vm304, %v279
      %309 = vst.msk [vmem:[#allocation2 + $0x20] sm:$0xff] %vm304, %v280
      %310 = vst.msk [vmem:[#allocation2 + $0x28] sm:$0xff] %vm304, %v281
      %311 = vst.msk [vmem:[#allocation2 + $0x30] sm:$0xff] %vm304, %v282
      %312 = vst.msk [vmem:[#allocation2 + $0x38] sm:$0xff] %vm304, %v283
      %313 = vst.msk [vmem:[#allocation2 + $0x40] sm:$0xff] %vm304, %v284
      %314 = vst.msk [vmem:[#allocation2 + $0x48] sm:$0xff] %vm304, %v285
      %315 = vst.msk [vmem:[#allocation2 + $0x50] sm:$0xff] %vm304, %v286
      %316 = vst.msk [vmem:[#allocation2 + $0x58] sm:$0xff] %vm304, %v287
      %317 = vst.msk [vmem:[#allocation2 + $0x60] sm:$0xff] %vm304, %v288
      %318 = vst.msk [vmem:[#allocation2 + $0x68] sm:$0xff] %vm304, %v289
      %v319 = vld [vmem:[%s191] sm:$0xf]
      %v320 = vld [vmem:[%s191 + $0x4] sm:$0xf]
      %v321 = vld [vmem:[%s191 + $0x8] sm:$0x1]
      %v322 = vld [vmem:[%s191 + $0xc] sm:$0xf]
      %v323 = vld [vmem:[%s191 + $0x10] sm:$0xf]
      %v324 = vld [vmem:[%s191 + $0x14] sm:$0x1]
      %v325 = vld [vmem:[%s191 + $0x18] sm:$0xf]
      %v326 = vld [vmem:[%s191 + $0x1c] sm:$0xf]
      %v327 = vld [vmem:[%s191 + $0x20] sm:$0x1]
      %v328 = vld [vmem:[%s191 + $0x24] sm:$0xf]
      %v329 = vld [vmem:[%s191 + $0x28] sm:$0xf]
      %v330 = vld [vmem:[%s191 + $0x2c] sm:$0x1]
      %v331 = vld [vmem:[%s191 + $0x30] sm:$0xf]
      %v332 = vld [vmem:[%s191 + $0x34] sm:$0xf]
      %v333 = vld [vmem:[%s191 + $0x38] sm:$0x1]
      %v334 = vld [vmem:[%s191 + $0x3c] sm:$0xf]
      %v335 = vld [vmem:[%s191 + $0x40] sm:$0xf]
      %v336 = vld [vmem:[%s191 + $0x44] sm:$0x1]
      %v337 = vld [vmem:[%s191 + $0x48] sm:$0xf]
      %v338 = vld [vmem:[%s191 + $0x4c] sm:$0xf]
      %v339 = vld [vmem:[%s191 + $0x50] sm:$0x1]
      %v340 = vld [vmem:[%s191 + $0x54] sm:$0xf]
      %v341 = vld [vmem:[%s191 + $0x58] sm:$0xf]
      %v342 = vld [vmem:[%s191 + $0x5c] sm:$0x1]
      %v343 = vld [vmem:[%s191 + $0x60] sm:$0xf]
      %v344 = vld [vmem:[%s191 + $0x64] sm:$0xf]
      %v345 = vld [vmem:[%s191 + $0x68] sm:$0x1]
      %v346 = vld [vmem:[%s191 + $0x6c] sm:$0xf]
      %v347 = vld [vmem:[%s191 + $0x70] sm:$0xf]
      %v348 = vld [vmem:[%s191 + $0x74] sm:$0x1]
      %v349 = vld [vmem:[%s191 + $0x78] sm:$0xf]
      %v350 = vld [vmem:[%s191 + $0x7c] sm:$0xf]
      %v351 = vld [vmem:[%s191 + $0x80] sm:$0x1]
      %v352 = vld [vmem:[%s191 + $0x84] sm:$0xf]
      %v353 = vld [vmem:[%s191 + $0x88] sm:$0xf]
      %v354 = vld [vmem:[%s191 + $0x8c] sm:$0x1]
      %v355 = vld [vmem:[%s191 + $0x90] sm:$0xf]
      %v356 = vld [vmem:[%s191 + $0x94] sm:$0xf]
      %v357 = vld [vmem:[%s191 + $0x98] sm:$0x1]
      %v358 = vld [vmem:[%s191 + $0x9c] sm:$0xf]
      %v359 = vld [vmem:[%s191 + $0xa0] sm:$0xf]
      %v360 = vld [vmem:[%s191 + $0xa4] sm:$0x1]
      %v403 = vunpack.c.l.b16 %v319
      %v404 = vunpack.c.l.b16 %v320
      %v405 = vunpack.c.l.b16 %v321
      %v406 = vunpack.c.l.b16 %v322
      %v407 = vunpack.c.l.b16 %v323
      %v408 = vunpack.c.l.b16 %v324
      %v409 = vunpack.c.l.b16 %v325
      %v410 = vunpack.c.l.b16 %v326
      %v411 = vunpack.c.l.b16 %v327
      %v412 = vunpack.c.l.b16 %v328
      %v413 = vunpack.c.l.b16 %v329
      %v414 = vunpack.c.l.b16 %v330
      %v415 = vunpack.c.l.b16 %v331
      %v416 = vunpack.c.l.b16 %v332
      %v417 = vunpack.c.l.b16 %v333
      %v418 = vunpack.c.l.b16 %v334
      %v419 = vunpack.c.l.b16 %v335
      %v420 = vunpack.c.l.b16 %v336
      %v421 = vunpack.c.l.b16 %v337
      %v422 = vunpack.c.l.b16 %v338
      %v423 = vunpack.c.l.b16 %v339
      %v424 = vunpack.c.l.b16 %v340
      %v425 = vunpack.c.l.b16 %v341
      %v426 = vunpack.c.l.b16 %v342
      %v427 = vunpack.c.l.b16 %v343
      %v428 = vunpack.c.l.b16 %v344
      %v429 = vunpack.c.l.b16 %v345
      %v430 = vunpack.c.l.b16 %v346
      %v431 = vunpack.c.l.b16 %v347
      %v432 = vunpack.c.l.b16 %v348
      %v433 = vunpack.c.l.b16 %v349
      %v434 = vunpack.c.l.b16 %v350
      %v435 = vunpack.c.l.b16 %v351
      %v436 = vunpack.c.l.b16 %v352
      %v437 = vunpack.c.l.b16 %v353
      %v438 = vunpack.c.l.b16 %v354
      %v439 = vunpack.c.l.b16 %v355
      %v440 = vunpack.c.l.b16 %v356
      %v441 = vunpack.c.l.b16 %v357
      %v442 = vunpack.c.l.b16 %v358
      %v443 = vunpack.c.l.b16 %v359
      %v444 = vunpack.c.l.b16 %v360
      %v445 = vpack.c.b16 %v404, %v403
      %v446 = vpack.c.b16 %v405, %v405
      %v447 = vpack.c.b16 %v407, %v406
      %v448 = vpack.c.b16 %v408, %v408
      %v449 = vpack.c.b16 %v410, %v409
      %v450 = vpack.c.b16 %v411, %v411
      %v451 = vpack.c.b16 %v413, %v412
      %v452 = vpack.c.b16 %v414, %v414
      %v453 = vpack.c.b16 %v416, %v415
      %v454 = vpack.c.b16 %v417, %v417
      %v455 = vpack.c.b16 %v419, %v418
      %v456 = vpack.c.b16 %v420, %v420
      %v457 = vpack.c.b16 %v422, %v421
      %v458 = vpack.c.b16 %v423, %v423
      %v459 = vpack.c.b16 %v425, %v424
      %v460 = vpack.c.b16 %v426, %v426
      %v461 = vpack.c.b16 %v428, %v427
      %v462 = vpack.c.b16 %v429, %v429
      %v463 = vpack.c.b16 %v431, %v430
      %v464 = vpack.c.b16 %v432, %v432
      %v465 = vpack.c.b16 %v434, %v433
      %v466 = vpack.c.b16 %v435, %v435
      %v467 = vpack.c.b16 %v437, %v436
      %v468 = vpack.c.b16 %v438, %v438
      %v469 = vpack.c.b16 %v440, %v439
      %v470 = vpack.c.b16 %v441, %v441
      %v471 = vpack.c.b16 %v443, %v442
      %v472 = vpack.c.b16 %v444, %v444
      %vm473 = vsmask.f32 7424
      %v475 = vshrl.u32 %v445, 16
      %v477 = vshll.u32 %v445, 16
      %v479 = vrot.slane %v477, 1
      %v480 = vor.u32 %v475, %v479
      %v482 = vshll.u32 %v446, 16
      %v484 = vrot.slane %v482, 1
      %v485 = vsel %vm473, %v480, %v484
      %v487 = vshrl.u32 %v447, 16
      %v489 = vshll.u32 %v447, 16
      %v491 = vrot.slane %v489, 1
      %v492 = vor.u32 %v487, %v491
      %v494 = vshll.u32 %v448, 16
      %v496 = vrot.slane %v494, 1
      %v497 = vsel %vm473, %v492, %v496
      %v499 = vshrl.u32 %v449, 16
      %v501 = vshll.u32 %v449, 16
      %v503 = vrot.slane %v501, 1
      %v504 = vor.u32 %v499, %v503
      %v506 = vshll.u32 %v450, 16
      %v508 = vrot.slane %v506, 1
      %v509 = vsel %vm473, %v504, %v508
      %v511 = vshrl.u32 %v451, 16
      %v513 = vshll.u32 %v451, 16
      %v515 = vrot.slane %v513, 1
      %v516 = vor.u32 %v511, %v515
      %v518 = vshll.u32 %v452, 16
      %v520 = vrot.slane %v518, 1
      %v521 = vsel %vm473, %v516, %v520
      %v523 = vshrl.u32 %v453, 16
      %v525 = vshll.u32 %v453, 16
      %v527 = vrot.slane %v525, 1
      %v528 = vor.u32 %v523, %v527
      %v530 = vshll.u32 %v454, 16
      %v532 = vrot.slane %v530, 1
      %v533 = vsel %vm473, %v528, %v532
      %v535 = vshrl.u32 %v455, 16
      %v537 = vshll.u32 %v455, 16
      %v539 = vrot.slane %v537, 1
      %v540 = vor.u32 %v535, %v539
      %v542 = vshll.u32 %v456, 16
      %v544 = vrot.slane %v542, 1
      %v545 = vsel %vm473, %v540, %v544
      %v547 = vshrl.u32 %v457, 16
      %v549 = vshll.u32 %v457, 16
      %v551 = vrot.slane %v549, 1
      %v552 = vor.u32 %v547, %v551
      %v554 = vshll.u32 %v458, 16
      %v556 = vrot.slane %v554, 1
      %v557 = vsel %vm473, %v552, %v556
      %v559 = vshrl.u32 %v459, 16
      %v561 = vshll.u32 %v459, 16
      %v563 = vrot.slane %v561, 1
      %v564 = vor.u32 %v559, %v563
      %v566 = vshll.u32 %v460, 16
      %v568 = vrot.slane %v566, 1
      %v569 = vsel %vm473, %v564, %v568
      %v571 = vshrl.u32 %v461, 16
      %v573 = vshll.u32 %v461, 16
      %v575 = vrot.slane %v573, 1
      %v576 = vor.u32 %v571, %v575
      %v578 = vshll.u32 %v462, 16
      %v580 = vrot.slane %v578, 1
      %v581 = vsel %vm473, %v576, %v580
      %v583 = vshrl.u32 %v463, 16
      %v585 = vshll.u32 %v463, 16
      %v587 = vrot.slane %v585, 1
      %v588 = vor.u32 %v583, %v587
      %v590 = vshll.u32 %v464, 16
      %v592 = vrot.slane %v590, 1
      %v593 = vsel %vm473, %v588, %v592
      %v595 = vshrl.u32 %v465, 16
      %v597 = vshll.u32 %v465, 16
      %v599 = vrot.slane %v597, 1
      %v600 = vor.u32 %v595, %v599
      %v602 = vshll.u32 %v466, 16
      %v604 = vrot.slane %v602, 1
      %v605 = vsel %vm473, %v600, %v604
      %v607 = vshrl.u32 %v467, 16
      %v609 = vshll.u32 %v467, 16
      %v611 = vrot.slane %v609, 1
      %v612 = vor.u32 %v607, %v611
      %v614 = vshll.u32 %v468, 16
      %v616 = vrot.slane %v614, 1
      %v617 = vsel %vm473, %v612, %v616
      %v619 = vshrl.u32 %v469, 16
      %v621 = vshll.u32 %v469, 16
      %v623 = vrot.slane %v621, 1
      %v624 = vor.u32 %v619, %v623
      %v626 = vshll.u32 %v470, 16
      %v628 = vrot.slane %v626, 1
      %v629 = vsel %vm473, %v624, %v628
      %v631 = vshrl.u32 %v471, 16
      %v633 = vshll.u32 %v471, 16
      %v635 = vrot.slane %v633, 1
      %v636 = vor.u32 %v631, %v635
      %v638 = vshll.u32 %v472, 16
      %v640 = vrot.slane %v638, 1
      %v641 = vsel %vm473, %v636, %v640
      %642 = vrot.lane.b32.xlu0 %v485, 4
      %v643 = vpop.permute.xlu0 %642
      %644 = vrot.lane.b32.xlu0 %v497, 4
      %v645 = vpop.permute.xlu0 %644
      %646 = vrot.lane.b32.xlu0 %v509, 4
      %v647 = vpop.permute.xlu0 %646
      %648 = vrot.lane.b32.xlu0 %v521, 4
      %v649 = vpop.permute.xlu0 %648
      %650 = vrot.lane.b32.xlu0 %v533, 4
      %v651 = vpop.permute.xlu0 %650
      %652 = vrot.lane.b32.xlu0 %v545, 4
      %v653 = vpop.permute.xlu0 %652
      %654 = vrot.lane.b32.xlu0 %v557, 4
      %v655 = vpop.permute.xlu0 %654
      %656 = vrot.lane.b32.xlu0 %v569, 4
      %v657 = vpop.permute.xlu0 %656
      %658 = vrot.lane.b32.xlu0 %v581, 4
      %v659 = vpop.permute.xlu0 %658
      %660 = vrot.lane.b32.xlu0 %v593, 4
      %v661 = vpop.permute.xlu0 %660
      %662 = vrot.lane.b32.xlu0 %v605, 4
      %v663 = vpop.permute.xlu0 %662
      %664 = vrot.lane.b32.xlu0 %v617, 4
      %v665 = vpop.permute.xlu0 %664
      %666 = vrot.lane.b32.xlu0 %v629, 4
      %v667 = vpop.permute.xlu0 %666
      %668 = vrot.lane.b32.xlu0 %v641, 4
      %v669 = vpop.permute.xlu0 %668
      %vm684 = vcmask 64544
      %685 = vst.msk [vmem:[#allocation2] sm:$0xff] %vm684, %v643
      %686 = vst.msk [vmem:[#allocation2 + $0x8] sm:$0xff] %vm684, %v645
      %687 = vst.msk [vmem:[#allocation2 + $0x10] sm:$0xff] %vm684, %v647
      %688 = vst.msk [vmem:[#allocation2 + $0x18] sm:$0xff] %vm684, %v649
      %689 = vst.msk [vmem:[#allocation2 + $0x20] sm:$0xff] %vm684, %v651
      %690 = vst.msk [vmem:[#allocation2 + $0x28] sm:$0xff] %vm684, %v653
      %691 = vst.msk [vmem:[#allocation2 + $0x30] sm:$0xff] %vm684, %v655
      %692 = vst.msk [vmem:[#allocation2 + $0x38] sm:$0xff] %vm684, %v657
      %693 = vst.msk [vmem:[#allocation2 + $0x40] sm:$0xff] %vm684, %v659
      %694 = vst.msk [vmem:[#allocation2 + $0x48] sm:$0xff] %vm684, %v661
      %695 = vst.msk [vmem:[#allocation2 + $0x50] sm:$0xff] %vm684, %v663
      %696 = vst.msk [vmem:[#allocation2 + $0x58] sm:$0xff] %vm684, %v665
      %697 = vst.msk [vmem:[#allocation2 + $0x60] sm:$0xff] %vm684, %v667
      %698 = vst.msk [vmem:[#allocation2 + $0x68] sm:$0xff] %vm684, %v669
      %v699 = vld [vmem:[%s191] sm:$0xe]
      %v700 = vld [vmem:[%s191 + $0x4] sm:$0xf]
      %v701 = vld [vmem:[%s191 + $0x8] sm:$0x1]
      %v702 = vld [vmem:[%s191 + $0xc] sm:$0xe]
      %v703 = vld [vmem:[%s191 + $0x10] sm:$0xf]
      %v704 = vld [vmem:[%s191 + $0x14] sm:$0x1]
      %v705 = vld [vmem:[%s191 + $0x18] sm:$0xe]
      %v706 = vld [vmem:[%s191 + $0x1c] sm:$0xf]
      %v707 = vld [vmem:[%s191 + $0x20] sm:$0x1]
      %v708 = vld [vmem:[%s191 + $0x24] sm:$0xe]
      %v709 = vld [vmem:[%s191 + $0x28] sm:$0xf]
      %v710 = vld [vmem:[%s191 + $0x2c] sm:$0x1]
      %v711 = vld [vmem:[%s191 + $0x30] sm:$0xe]
      %v712 = vld [vmem:[%s191 + $0x34] sm:$0xf]
      %v713 = vld [vmem:[%s191 + $0x38] sm:$0x1]
      %v714 = vld [vmem:[%s191 + $0x3c] sm:$0xe]
      %v715 = vld [vmem:[%s191 + $0x40] sm:$0xf]
      %v716 = vld [vmem:[%s191 + $0x44] sm:$0x1]
      %v717 = vld [vmem:[%s191 + $0x48] sm:$0xe]
      %v718 = vld [vmem:[%s191 + $0x4c] sm:$0xf]
      %v719 = vld [vmem:[%s191 + $0x50] sm:$0x1]
      %v720 = vld [vmem:[%s191 + $0x54] sm:$0xe]
      %v721 = vld [vmem:[%s191 + $0x58] sm:$0xf]
      %v722 = vld [vmem:[%s191 + $0x5c] sm:$0x1]
      %v723 = vld [vmem:[%s191 + $0x60] sm:$0xe]
      %v724 = vld [vmem:[%s191 + $0x64] sm:$0xf]
      %v725 = vld [vmem:[%s191 + $0x68] sm:$0x1]
      %v726 = vld [vmem:[%s191 + $0x6c] sm:$0xe]
      %v727 = vld [vmem:[%s191 + $0x70] sm:$0xf]
      %v728 = vld [vmem:[%s191 + $0x74] sm:$0x1]
      %v729 = vld [vmem:[%s191 + $0x78] sm:$0xe]
      %v730 = vld [vmem:[%s191 + $0x7c] sm:$0xf]
      %v731 = vld [vmem:[%s191 + $0x80] sm:$0x1]
      %v732 = vld [vmem:[%s191 + $0x84] sm:$0xe]
      %v733 = vld [vmem:[%s191 + $0x88] sm:$0xf]
      %v734 = vld [vmem:[%s191 + $0x8c] sm:$0x1]
      %v735 = vld [vmem:[%s191 + $0x90] sm:$0xe]
      %v736 = vld [vmem:[%s191 + $0x94] sm:$0xf]
      %v737 = vld [vmem:[%s191 + $0x98] sm:$0x1]
      %v738 = vld [vmem:[%s191 + $0x9c] sm:$0xe]
      %v739 = vld [vmem:[%s191 + $0xa0] sm:$0xf]
      %v740 = vld [vmem:[%s191 + $0xa4] sm:$0x1]
      %v783 = vunpack.c.l.b16 %v699
      %v784 = vunpack.c.l.b16 %v700
      %v785 = vunpack.c.l.b16 %v701
      %v786 = vunpack.c.l.b16 %v702
      %v787 = vunpack.c.l.b16 %v703
      %v788 = vunpack.c.l.b16 %v704
      %v789 = vunpack.c.l.b16 %v705
      %v790 = vunpack.c.l.b16 %v706
      %v791 = vunpack.c.l.b16 %v707
      %v792 = vunpack.c.l.b16 %v708
      %v793 = vunpack.c.l.b16 %v709
      %v794 = vunpack.c.l.b16 %v710
      %v795 = vunpack.c.l.b16 %v711
      %v796 = vunpack.c.l.b16 %v712
      %v797 = vunpack.c.l.b16 %v713
      %v798 = vunpack.c.l.b16 %v714
      %v799 = vunpack.c.l.b16 %v715
      %v800 = vunpack.c.l.b16 %v716
      %v801 = vunpack.c.l.b16 %v717
      %v802 = vunpack.c.l.b16 %v718
      %v803 = vunpack.c.l.b16 %v719
      %v804 = vunpack.c.l.b16 %v720
      %v805 = vunpack.c.l.b16 %v721
      %v806 = vunpack.c.l.b16 %v722
      %v807 = vunpack.c.l.b16 %v723
      %v808 = vunpack.c.l.b16 %v724
      %v809 = vunpack.c.l.b16 %v725
      %v810 = vunpack.c.l.b16 %v726
      %v811 = vunpack.c.l.b16 %v727
      %v812 = vunpack.c.l.b16 %v728
      %v813 = vunpack.c.l.b16 %v729
      %v814 = vunpack.c.l.b16 %v730
      %v815 = vunpack.c.l.b16 %v731
      %v816 = vunpack.c.l.b16 %v732
      %v817 = vunpack.c.l.b16 %v733
      %v818 = vunpack.c.l.b16 %v734
      %v819 = vunpack.c.l.b16 %v735
      %v820 = vunpack.c.l.b16 %v736
      %v821 = vunpack.c.l.b16 %v737
      %v822 = vunpack.c.l.b16 %v738
      %v823 = vunpack.c.l.b16 %v739
      %v824 = vunpack.c.l.b16 %v740
      %v825 = vpack.c.b16 %v784, %v783
      %v826 = vpack.c.b16 %v785, %v785
      %v827 = vpack.c.b16 %v787, %v786
      %v828 = vpack.c.b16 %v788, %v788
      %v829 = vpack.c.b16 %v790, %v789
      %v830 = vpack.c.b16 %v791, %v791
      %v831 = vpack.c.b16 %v793, %v792
      %v832 = vpack.c.b16 %v794, %v794
      %v833 = vpack.c.b16 %v796, %v795
      %v834 = vpack.c.b16 %v797, %v797
      %v835 = vpack.c.b16 %v799, %v798
      %v836 = vpack.c.b16 %v800, %v800
      %v837 = vpack.c.b16 %v802, %v801
      %v838 = vpack.c.b16 %v803, %v803
      %v839 = vpack.c.b16 %v805, %v804
      %v840 = vpack.c.b16 %v806, %v806
      %v841 = vpack.c.b16 %v808, %v807
      %v842 = vpack.c.b16 %v809, %v809
      %v843 = vpack.c.b16 %v811, %v810
      %v844 = vpack.c.b16 %v812, %v812
      %v845 = vpack.c.b16 %v814, %v813
      %v846 = vpack.c.b16 %v815, %v815
      %v847 = vpack.c.b16 %v817, %v816
      %v848 = vpack.c.b16 %v818, %v818
      %v849 = vpack.c.b16 %v820, %v819
      %v850 = vpack.c.b16 %v821, %v821
      %v851 = vpack.c.b16 %v823, %v822
      %v852 = vpack.c.b16 %v824, %v824
      %vm853 = vcmask 1046528
      %v854 = vrot.slane %v825, 1
      %v855 = vrot.slane %v826, 1
      %v856 = vsel %vm853, %v854, %v855
      %v857 = vrot.slane %v827, 1
      %v858 = vrot.slane %v828, 1
      %v859 = vsel %vm853, %v857, %v858
      %v860 = vrot.slane %v829, 1
      %v861 = vrot.slane %v830, 1
      %v862 = vsel %vm853, %v860, %v861
      %v863 = vrot.slane %v831, 1
      %v864 = vrot.slane %v832, 1
      %v865 = vsel %vm853, %v863, %v864
      %v866 = vrot.slane %v833, 1
      %v867 = vrot.slane %v834, 1
      %v868 = vsel %vm853, %v866, %v867
      %v869 = vrot.slane %v835, 1
      %v870 = vrot.slane %v836, 1
      %v871 = vsel %vm853, %v869, %v870
      %v872 = vrot.slane %v837, 1
      %v873 = vrot.slane %v838, 1
      %v874 = vsel %vm853, %v872, %v873
      %v875 = vrot.slane %v839, 1
      %v876 = vrot.slane %v840, 1
      %v877 = vsel %vm853, %v875, %v876
      %v878 = vrot.slane %v841, 1
      %v879 = vrot.slane %v842, 1
      %v880 = vsel %vm853, %v878, %v879
      %v881 = vrot.slane %v843, 1
      %v882 = vrot.slane %v844, 1
      %v883 = vsel %vm853, %v881, %v882
      %v884 = vrot.slane %v845, 1
      %v885 = vrot.slane %v846, 1
      %v886 = vsel %vm853, %v884, %v885
      %v887 = vrot.slane %v847, 1
      %v888 = vrot.slane %v848, 1
      %v889 = vsel %vm853, %v887, %v888
      %v890 = vrot.slane %v849, 1
      %v891 = vrot.slane %v850, 1
      %v892 = vsel %vm853, %v890, %v891
      %v893 = vrot.slane %v851, 1
      %v894 = vrot.slane %v852, 1
      %v895 = vsel %vm853, %v893, %v894
      %896 = vrot.lane.b32.xlu0 %v856, 8
      %v897 = vpop.permute.xlu0 %896
      %898 = vrot.lane.b32.xlu0 %v859, 8
      %v899 = vpop.permute.xlu0 %898
      %900 = vrot.lane.b32.xlu0 %v862, 8
      %v901 = vpop.permute.xlu0 %900
      %902 = vrot.lane.b32.xlu0 %v865, 8
      %v903 = vpop.permute.xlu0 %902
      %904 = vrot.lane.b32.xlu0 %v868, 8
      %v905 = vpop.permute.xlu0 %904
      %906 = vrot.lane.b32.xlu0 %v871, 8
      %v907 = vpop.permute.xlu0 %906
      %908 = vrot.lane.b32.xlu0 %v874, 8
      %v909 = vpop.permute.xlu0 %908
      %910 = vrot.lane.b32.xlu0 %v877, 8
      %v911 = vpop.permute.xlu0 %910
      %912 = vrot.lane.b32.xlu0 %v880, 8
      %v913 = vpop.permute.xlu0 %912
      %914 = vrot.lane.b32.xlu0 %v883, 8
      %v915 = vpop.permute.xlu0 %914
      %916 = vrot.lane.b32.xlu0 %v886, 8
      %v917 = vpop.permute.xlu0 %916
      %918 = vrot.lane.b32.xlu0 %v889, 8
      %v919 = vpop.permute.xlu0 %918
      %920 = vrot.lane.b32.xlu0 %v892, 8
      %v921 = vpop.permute.xlu0 %920
      %922 = vrot.lane.b32.xlu0 %v895, 8
      %v923 = vpop.permute.xlu0 %922
      %vm938 = vcmask 97344
      %939 = vst.msk [vmem:[#allocation2] sm:$0xff] %vm938, %v897
      %940 = vst.msk [vmem:[#allocation2 + $0x8] sm:$0xff] %vm938, %v899
      %941 = vst.msk [vmem:[#allocation2 + $0x10] sm:$0xff] %vm938, %v901
      %942 = vst.msk [vmem:[#allocation2 + $0x18] sm:$0xff] %vm938, %v903
      %943 = vst.msk [vmem:[#allocation2 + $0x20] sm:$0xff] %vm938, %v905
      %944 = vst.msk [vmem:[#allocation2 + $0x28] sm:$0xff] %vm938, %v907
      %945 = vst.msk [vmem:[#allocation2 + $0x30] sm:$0xff] %vm938, %v909
      %946 = vst.msk [vmem:[#allocation2 + $0x38] sm:$0xff] %vm938, %v911
      %947 = vst.msk [vmem:[#allocation2 + $0x40] sm:$0xff] %vm938, %v913
      %948 = vst.msk [vmem:[#allocation2 + $0x48] sm:$0xff] %vm938, %v915
      %949 = vst.msk [vmem:[#allocation2 + $0x50] sm:$0xff] %vm938, %v917
      %950 = vst.msk [vmem:[#allocation2 + $0x58] sm:$0xff] %vm938, %v919
      %951 = vst.msk [vmem:[#allocation2 + $0x60] sm:$0xff] %vm938, %v921
      %952 = vst.msk [vmem:[#allocation2 + $0x68] sm:$0xff] %vm938, %v923
      %s953 = sadd.s32 %s188, 1
      %s954 = smul.u32 %s953, 3
      %s955 = smul.addr %s954, 4
      %s956 = scalar_lea.vmem %s171, %s955
      %v957 = vld [vmem:[%s956] sm:$0xf]
      %v958 = vld [vmem:[%s956 + $0x4] sm:$0xf]
      %v959 = vld [vmem:[%s956 + $0xc] sm:$0xf]
      %v960 = vld [vmem:[%s956 + $0x10] sm:$0xf]
      %v961 = vld [vmem:[%s956 + $0x18] sm:$0xf]
      %v962 = vld [vmem:[%s956 + $0x1c] sm:$0xf]
      %v963 = vld [vmem:[%s956 + $0x24] sm:$0xf]
      %v964 = vld [vmem:[%s956 + $0x28] sm:$0xf]
      %v965 = vld [vmem:[%s956 + $0x30] sm:$0xf]
      %v966 = vld [vmem:[%s956 + $0x34] sm:$0xf]
      %v967 = vld [vmem:[%s956 + $0x3c] sm:$0xf]
      %v968 = vld [vmem:[%s956 + $0x40] sm:$0xf]
      %v969 = vld [vmem:[%s956 + $0x48] sm:$0xf]
      %v970 = vld [vmem:[%s956 + $0x4c] sm:$0xf]
      %v971 = vld [vmem:[%s956 + $0x54] sm:$0xf]
      %v972 = vld [vmem:[%s956 + $0x58] sm:$0xf]
      %v973 = vld [vmem:[%s956 + $0x60] sm:$0xf]
      %v974 = vld [vmem:[%s956 + $0x64] sm:$0xf]
      %v975 = vld [vmem:[%s956 + $0x6c] sm:$0xf]
      %v976 = vld [vmem:[%s956 + $0x70] sm:$0xf]
      %v977 = vld [vmem:[%s956 + $0x78] sm:$0xf]
      %v978 = vld [vmem:[%s956 + $0x7c] sm:$0xf]
      %v979 = vld [vmem:[%s956 + $0x84] sm:$0xf]
      %v980 = vld [vmem:[%s956 + $0x88] sm:$0xf]
      %v981 = vld [vmem:[%s956 + $0x90] sm:$0xf]
      %v982 = vld [vmem:[%s956 + $0x94] sm:$0xf]
      %v983 = vld [vmem:[%s956 + $0x9c] sm:$0xf]
      %v984 = vld [vmem:[%s956 + $0xa0] sm:$0xf]
      %v1013 = vunpack.c.l.b16 %v957
      %v1014 = vunpack.c.l.b16 %v958
      %v1015 = vunpack.c.l.b16 %v959
      %v1016 = vunpack.c.l.b16 %v960
      %v1017 = vunpack.c.l.b16 %v961
      %v1018 = vunpack.c.l.b16 %v962
      %v1019 = vunpack.c.l.b16 %v963
      %v1020 = vunpack.c.l.b16 %v964
      %v1021 = vunpack.c.l.b16 %v965
      %v1022 = vunpack.c.l.b16 %v966
      %v1023 = vunpack.c.l.b16 %v967
      %v1024 = vunpack.c.l.b16 %v968
      %v1025 = vunpack.c.l.b16 %v969
      %v1026 = vunpack.c.l.b16 %v970
      %v1027 = vunpack.c.l.b16 %v971
      %v1028 = vunpack.c.l.b16 %v972
      %v1029 = vunpack.c.l.b16 %v973
      %v1030 = vunpack.c.l.b16 %v974
      %v1031 = vunpack.c.l.b16 %v975
      %v1032 = vunpack.c.l.b16 %v976
      %v1033 = vunpack.c.l.b16 %v977
      %v1034 = vunpack.c.l.b16 %v978
      %v1035 = vunpack.c.l.b16 %v979
      %v1036 = vunpack.c.l.b16 %v980
      %v1037 = vunpack.c.l.b16 %v981
      %v1038 = vunpack.c.l.b16 %v982
      %v1039 = vunpack.c.l.b16 %v983
      %v1040 = vunpack.c.l.b16 %v984
      %v1041 = vpack.c.b16 %v1014, %v1013
      %v1042 = vpack.c.b16 %v1016, %v1015
      %v1043 = vpack.c.b16 %v1018, %v1017
      %v1044 = vpack.c.b16 %v1020, %v1019
      %v1045 = vpack.c.b16 %v1022, %v1021
      %v1046 = vpack.c.b16 %v1024, %v1023
      %v1047 = vpack.c.b16 %v1026, %v1025
      %v1048 = vpack.c.b16 %v1028, %v1027
      %v1049 = vpack.c.b16 %v1030, %v1029
      %v1050 = vpack.c.b16 %v1032, %v1031
      %v1051 = vpack.c.b16 %v1034, %v1033
      %v1052 = vpack.c.b16 %v1036, %v1035
      %v1053 = vpack.c.b16 %v1038, %v1037
      %v1054 = vpack.c.b16 %v1040, %v1039
      %1055 = vrot.lane.b32.xlu0 %v1041, 12
      %v1056 = vpop.permute.xlu0 %1055
      %1057 = vrot.lane.b32.xlu0 %v1042, 12
      %v1058 = vpop.permute.xlu0 %1057
      %1059 = vrot.lane.b32.xlu0 %v1043, 12
      %v1060 = vpop.permute.xlu0 %1059
      %1061 = vrot.lane.b32.xlu0 %v1044, 12
      %v1062 = vpop.permute.xlu0 %1061
      %1063 = vrot.lane.b32.xlu0 %v1045, 12
      %v1064 = vpop.permute.xlu0 %1063
      %1065 = vrot.lane.b32.xlu0 %v1046, 12
      %v1066 = vpop.permute.xlu0 %1065
      %1067 = vrot.lane.b32.xlu0 %v1047, 12
      %v1068 = vpop.permute.xlu0 %1067
      %1069 = vrot.lane.b32.xlu0 %v1048, 12
      %v1070 = vpop.permute.xlu0 %1069
      %1071 = vrot.lane.b32.xlu0 %v1049, 12
      %v1072 = vpop.permute.xlu0 %1071
      %1073 = vrot.lane.b32.xlu0 %v1050, 12
      %v1074 = vpop.permute.xlu0 %1073
      %1075 = vrot.lane.b32.xlu0 %v1051, 12
      %v1076 = vpop.permute.xlu0 %1075
      %1077 = vrot.lane.b32.xlu0 %v1052, 12
      %v1078 = vpop.permute.xlu0 %1077
      %1079 = vrot.lane.b32.xlu0 %v1053, 12
      %v1080 = vpop.permute.xlu0 %1079
      %1081 = vrot.lane.b32.xlu0 %v1054, 12
      %v1082 = vpop.permute.xlu0 %1081
      %vm1097 = vcmask 130144
      %1098 = vst.msk [vmem:[#allocation2] sm:$0xff] %vm1097, %v1056
      %1099 = vst.msk [vmem:[#allocation2 + $0x8] sm:$0xff] %vm1097, %v1058
      %1100 = vst.msk [vmem:[#allocation2 + $0x10] sm:$0xff] %vm1097, %v1060
      %1101 = vst.msk [vmem:[#allocation2 + $0x18] sm:$0xff] %vm1097, %v1062
      %1102 = vst.msk [vmem:[#allocation2 + $0x20] sm:$0xff] %vm1097, %v1064
      %1103 = vst.msk [vmem:[#allocation2 + $0x28] sm:$0xff] %vm1097, %v1066
      %1104 = vst.msk [vmem:[#allocation2 + $0x30] sm:$0xff] %vm1097, %v1068
      %1105 = vst.msk [vmem:[#allocation2 + $0x38] sm:$0xff] %vm1097, %v1070
      %1106 = vst.msk [vmem:[#allocation2 + $0x40] sm:$0xff] %vm1097, %v1072
      %1107 = vst.msk [vmem:[#allocation2 + $0x48] sm:$0xff] %vm1097, %v1074
      %1108 = vst.msk [vmem:[#allocation2 + $0x50] sm:$0xff] %vm1097, %v1076
      %1109 = vst.msk [vmem:[#allocation2 + $0x58] sm:$0xff] %vm1097, %v1078
      %1110 = vst.msk [vmem:[#allocation2 + $0x60] sm:$0xff] %vm1097, %v1080
      %1111 = vst.msk [vmem:[#allocation2 + $0x68] sm:$0xff] %vm1097, %v1082
      %v1112 = vld [vmem:[%s956] sm:$0xf]
      %v1113 = vld [vmem:[%s956 + $0x4] sm:$0xf]
      %v1114 = vld [vmem:[%s956 + $0x8] sm:$0x1]
      %v1115 = vld [vmem:[%s956 + $0xc] sm:$0xf]
      %v1116 = vld [vmem:[%s956 + $0x10] sm:$0xf]
      %v1117 = vld [vmem:[%s956 + $0x14] sm:$0x1]
      %v1118 = vld [vmem:[%s956 + $0x18] sm:$0xf]
      %v1119 = vld [vmem:[%s956 + $0x1c] sm:$0xf]
      %v1120 = vld [vmem:[%s956 + $0x20] sm:$0x1]
      %v1121 = vld [vmem:[%s956 + $0x24] sm:$0xf]
      %v1122 = vld [vmem:[%s956 + $0x28] sm:$0xf]
      %v1123 = vld [vmem:[%s956 + $0x2c] sm:$0x1]
      %v1124 = vld [vmem:[%s956 + $0x30] sm:$0xf]
      %v1125 = vld [vmem:[%s956 + $0x34] sm:$0xf]
      %v1126 = vld [vmem:[%s956 + $0x38] sm:$0x1]
      %v1127 = vld [vmem:[%s956 + $0x3c] sm:$0xf]
      %v1128 = vld [vmem:[%s956 + $0x40] sm:$0xf]
      %v1129 = vld [vmem:[%s956 + $0x44] sm:$0x1]
      %v1130 = vld [vmem:[%s956 + $0x48] sm:$0xf]
      %v1131 = vld [vmem:[%s956 + $0x4c] sm:$0xf]
      %v1132 = vld [vmem:[%s956 + $0x50] sm:$0x1]
      %v1133 = vld [vmem:[%s956 + $0x54] sm:$0xf]
      %v1134 = vld [vmem:[%s956 + $0x58] sm:$0xf]
      %v1135 = vld [vmem:[%s956 + $0x5c] sm:$0x1]
      %v1136 = vld [vmem:[%s956 + $0x60] sm:$0xf]
      %v1137 = vld [vmem:[%s956 + $0x64] sm:$0xf]
      %v1138 = vld [vmem:[%s956 + $0x68] sm:$0x1]
      %v1139 = vld [vmem:[%s956 + $0x6c] sm:$0xf]
      %v1140 = vld [vmem:[%s956 + $0x70] sm:$0xf]
      %v1141 = vld [vmem:[%s956 + $0x74] sm:$0x1]
      %v1142 = vld [vmem:[%s956 + $0x78] sm:$0xf]
      %v1143 = vld [vmem:[%s956 + $0x7c] sm:$0xf]
      %v1144 = vld [vmem:[%s956 + $0x80] sm:$0x1]
      %v1145 = vld [vmem:[%s956 + $0x84] sm:$0xf]
      %v1146 = vld [vmem:[%s956 + $0x88] sm:$0xf]
      %v1147 = vld [vmem:[%s956 + $0x8c] sm:$0x1]
      %v1148 = vld [vmem:[%s956 + $0x90] sm:$0xf]
      %v1149 = vld [vmem:[%s956 + $0x94] sm:$0xf]
      %v1150 = vld [vmem:[%s956 + $0x98] sm:$0x1]
      %v1151 = vld [vmem:[%s956 + $0x9c] sm:$0xf]
      %v1152 = vld [vmem:[%s956 + $0xa0] sm:$0xf]
      %v1153 = vld [vmem:[%s956 + $0xa4] sm:$0x1]
      %v1196 = vunpack.c.l.b16 %v1112
      %v1197 = vunpack.c.l.b16 %v1113
      %v1198 = vunpack.c.l.b16 %v1114
      %v1199 = vunpack.c.l.b16 %v1115
      %v1200 = vunpack.c.l.b16 %v1116
      %v1201 = vunpack.c.l.b16 %v1117
      %v1202 = vunpack.c.l.b16 %v1118
      %v1203 = vunpack.c.l.b16 %v1119
      %v1204 = vunpack.c.l.b16 %v1120
      %v1205 = vunpack.c.l.b16 %v1121
      %v1206 = vunpack.c.l.b16 %v1122
      %v1207 = vunpack.c.l.b16 %v1123
      %v1208 = vunpack.c.l.b16 %v1124
      %v1209 = vunpack.c.l.b16 %v1125
      %v1210 = vunpack.c.l.b16 %v1126
      %v1211 = vunpack.c.l.b16 %v1127
      %v1212 = vunpack.c.l.b16 %v1128
      %v1213 = vunpack.c.l.b16 %v1129
      %v1214 = vunpack.c.l.b16 %v1130
      %v1215 = vunpack.c.l.b16 %v1131
      %v1216 = vunpack.c.l.b16 %v1132
      %v1217 = vunpack.c.l.b16 %v1133
      %v1218 = vunpack.c.l.b16 %v1134
      %v1219 = vunpack.c.l.b16 %v1135
      %v1220 = vunpack.c.l.b16 %v1136
      %v1221 = vunpack.c.l.b16 %v1137
      %v1222 = vunpack.c.l.b16 %v1138
      %v1223 = vunpack.c.l.b16 %v1139
      %v1224 = vunpack.c.l.b16 %v1140
      %v1225 = vunpack.c.l.b16 %v1141
      %v1226 = vunpack.c.l.b16 %v1142
      %v1227 = vunpack.c.l.b16 %v1143
      %v1228 = vunpack.c.l.b16 %v1144
      %v1229 = vunpack.c.l.b16 %v1145
      %v1230 = vunpack.c.l.b16 %v1146
      %v1231 = vunpack.c.l.b16 %v1147
      %v1232 = vunpack.c.l.b16 %v1148
      %v1233 = vunpack.c.l.b16 %v1149
      %v1234 = vunpack.c.l.b16 %v1150
      %v1235 = vunpack.c.l.b16 %v1151
      %v1236 = vunpack.c.l.b16 %v1152
      %v1237 = vunpack.c.l.b16 %v1153
      %v1238 = vpack.c.b16 %v1197, %v1196
      %v1239 = vpack.c.b16 %v1198, %v1198
      %v1240 = vpack.c.b16 %v1200, %v1199
      %v1241 = vpack.c.b16 %v1201, %v1201
      %v1242 = vpack.c.b16 %v1203, %v1202
      %v1243 = vpack.c.b16 %v1204, %v1204
      %v1244 = vpack.c.b16 %v1206, %v1205
      %v1245 = vpack.c.b16 %v1207, %v1207
      %v1246 = vpack.c.b16 %v1209, %v1208
      %v1247 = vpack.c.b16 %v1210, %v1210
      %v1248 = vpack.c.b16 %v1212, %v1211
      %v1249 = vpack.c.b16 %v1213, %v1213
      %v1250 = vpack.c.b16 %v1215, %v1214
      %v1251 = vpack.c.b16 %v1216, %v1216
      %v1252 = vpack.c.b16 %v1218, %v1217
      %v1253 = vpack.c.b16 %v1219, %v1219
      %v1254 = vpack.c.b16 %v1221, %v1220
      %v1255 = vpack.c.b16 %v1222, %v1222
      %v1256 = vpack.c.b16 %v1224, %v1223
      %v1257 = vpack.c.b16 %v1225, %v1225
      %v1258 = vpack.c.b16 %v1227, %v1226
      %v1259 = vpack.c.b16 %v1228, %v1228
      %v1260 = vpack.c.b16 %v1230, %v1229
      %v1261 = vpack.c.b16 %v1231, %v1231
      %v1262 = vpack.c.b16 %v1233, %v1232
      %v1263 = vpack.c.b16 %v1234, %v1234
      %v1264 = vpack.c.b16 %v1236, %v1235
      %v1265 = vpack.c.b16 %v1237, %v1237
      %v1267 = vshrl.u32 %v1238, 16
      %v1269 = vshll.u32 %v1238, 16
      %v1271 = vrot.slane %v1269, 1
      %v1272 = vor.u32 %v1267, %v1271
      %v1274 = vshll.u32 %v1239, 16
      %v1276 = vrot.slane %v1274, 1
      %v1277 = vsel %vm473, %v1272, %v1276
      %v1279 = vshrl.u32 %v1240, 16
      %v1281 = vshll.u32 %v1240, 16
      %v1283 = vrot.slane %v1281, 1
      %v1284 = vor.u32 %v1279, %v1283
      %v1286 = vshll.u32 %v1241, 16
      %v1288 = vrot.slane %v1286, 1
      %v1289 = vsel %vm473, %v1284, %v1288
      %v1291 = vshrl.u32 %v1242, 16
      %v1293 = vshll.u32 %v1242, 16
      %v1295 = vrot.slane %v1293, 1
      %v1296 = vor.u32 %v1291, %v1295
      %v1298 = vshll.u32 %v1243, 16
      %v1300 = vrot.slane %v1298, 1
      %v1301 = vsel %vm473, %v1296, %v1300
      %v1303 = vshrl.u32 %v1244, 16
      %v1305 = vshll.u32 %v1244, 16
      %v1307 = vrot.slane %v1305, 1
      %v1308 = vor.u32 %v1303, %v1307
      %v1310 = vshll.u32 %v1245, 16
      %v1312 = vrot.slane %v1310, 1
      %v1313 = vsel %vm473, %v1308, %v1312
      %v1315 = vshrl.u32 %v1246, 16
      %v1317 = vshll.u32 %v1246, 16
      %v1319 = vrot.slane %v1317, 1
      %v1320 = vor.u32 %v1315, %v1319
      %v1322 = vshll.u32 %v1247, 16
      %v1324 = vrot.slane %v1322, 1
      %v1325 = vsel %vm473, %v1320, %v1324
      %v1327 = vshrl.u32 %v1248, 16
      %v1329 = vshll.u32 %v1248, 16
      %v1331 = vrot.slane %v1329, 1
      %v1332 = vor.u32 %v1327, %v1331
      %v1334 = vshll.u32 %v1249, 16
      %v1336 = vrot.slane %v1334, 1
      %v1337 = vsel %vm473, %v1332, %v1336
      %v1339 = vshrl.u32 %v1250, 16
      %v1341 = vshll.u32 %v1250, 16
      %v1343 = vrot.slane %v1341, 1
      %v1344 = vor.u32 %v1339, %v1343
      %v1346 = vshll.u32 %v1251, 16
      %v1348 = vrot.slane %v1346, 1
      %v1349 = vsel %vm473, %v1344, %v1348
      %v1351 = vshrl.u32 %v1252, 16
      %v1353 = vshll.u32 %v1252, 16
      %v1355 = vrot.slane %v1353, 1
      %v1356 = vor.u32 %v1351, %v1355
      %v1358 = vshll.u32 %v1253, 16
      %v1360 = vrot.slane %v1358, 1
      %v1361 = vsel %vm473, %v1356, %v1360
      %v1363 = vshrl.u32 %v1254, 16
      %v1365 = vshll.u32 %v1254, 16
      %v1367 = vrot.slane %v1365, 1
      %v1368 = vor.u32 %v1363, %v1367
      %v1370 = vshll.u32 %v1255, 16
      %v1372 = vrot.slane %v1370, 1
      %v1373 = vsel %vm473, %v1368, %v1372
      %v1375 = vshrl.u32 %v1256, 16
      %v1377 = vshll.u32 %v1256, 16
      %v1379 = vrot.slane %v1377, 1
      %v1380 = vor.u32 %v1375, %v1379
      %v1382 = vshll.u32 %v1257, 16
      %v1384 = vrot.slane %v1382, 1
      %v1385 = vsel %vm473, %v1380, %v1384
      %v1387 = vshrl.u32 %v1258, 16
      %v1389 = vshll.u32 %v1258, 16
      %v1391 = vrot.slane %v1389, 1
      %v1392 = vor.u32 %v1387, %v1391
      %v1394 = vshll.u32 %v1259, 16
      %v1396 = vrot.slane %v1394, 1
      %v1397 = vsel %vm473, %v1392, %v1396
      %v1399 = vshrl.u32 %v1260, 16
      %v1401 = vshll.u32 %v1260, 16
      %v1403 = vrot.slane %v1401, 1
      %v1404 = vor.u32 %v1399, %v1403
      %v1406 = vshll.u32 %v1261, 16
      %v1408 = vrot.slane %v1406, 1
      %v1409 = vsel %vm473, %v1404, %v1408
      %v1411 = vshrl.u32 %v1262, 16
      %v1413 = vshll.u32 %v1262, 16
      %v1415 = vrot.slane %v1413, 1
      %v1416 = vor.u32 %v1411, %v1415
      %v1418 = vshll.u32 %v1263, 16
      %v1420 = vrot.slane %v1418, 1
      %v1421 = vsel %vm473, %v1416, %v1420
      %v1423 = vshrl.u32 %v1264, 16
      %v1425 = vshll.u32 %v1264, 16
      %v1427 = vrot.slane %v1425, 1
      %v1428 = vor.u32 %v1423, %v1427
      %v1430 = vshll.u32 %v1265, 16
      %v1432 = vrot.slane %v1430, 1
      %v1433 = vsel %vm473, %v1428, %v1432
      %1434 = vrot.lane.b32.xlu0 %v1277, 16
      %v1435 = vpop.permute.xlu0 %1434
      %1436 = vrot.lane.b32.xlu0 %v1289, 16
      %v1437 = vpop.permute.xlu0 %1436
      %1438 = vrot.lane.b32.xlu0 %v1301, 16
      %v1439 = vpop.permute.xlu0 %1438
      %1440 = vrot.lane.b32.xlu0 %v1313, 16
      %v1441 = vpop.permute.xlu0 %1440
      %1442 = vrot.lane.b32.xlu0 %v1325, 16
      %v1443 = vpop.permute.xlu0 %1442
      %1444 = vrot.lane.b32.xlu0 %v1337, 16
      %v1445 = vpop.permute.xlu0 %1444
      %1446 = vrot.lane.b32.xlu0 %v1349, 16
      %v1447 = vpop.permute.xlu0 %1446
      %1448 = vrot.lane.b32.xlu0 %v1361, 16
      %v1449 = vpop.permute.xlu0 %1448
      %1450 = vrot.lane.b32.xlu0 %v1373, 16
      %v1451 = vpop.permute.xlu0 %1450
      %1452 = vrot.lane.b32.xlu0 %v1385, 16
      %v1453 = vpop.permute.xlu0 %1452
      %1454 = vrot.lane.b32.xlu0 %v1397, 16
      %v1455 = vpop.permute.xlu0 %1454
      %1456 = vrot.lane.b32.xlu0 %v1409, 16
      %v1457 = vpop.permute.xlu0 %1456
      %1458 = vrot.lane.b32.xlu0 %v1421, 16
      %v1459 = vpop.permute.xlu0 %1458
      %1460 = vrot.lane.b32.xlu0 %v1433, 16
      %v1461 = vpop.permute.xlu0 %1460
      %vm1476 = vcmask 162944
      %1477 = vst.msk [vmem:[#allocation2] sm:$0xff] %vm1476, %v1435
      %1478 = vst.msk [vmem:[#allocation2 + $0x8] sm:$0xff] %vm1476, %v1437
      %1479 = vst.msk [vmem:[#allocation2 + $0x10] sm:$0xff] %vm1476, %v1439
      %1480 = vst.msk [vmem:[#allocation2 + $0x18] sm:$0xff] %vm1476, %v1441
      %1481 = vst.msk [vmem:[#allocation2 + $0x20] sm:$0xff] %vm1476, %v1443
      %1482 = vst.msk [vmem:[#allocation2 + $0x28] sm:$0xff] %vm1476, %v1445
      %1483 = vst.msk [vmem:[#allocation2 + $0x30] sm:$0xff] %vm1476, %v1447
      %1484 = vst.msk [vmem:[#allocation2 + $0x38] sm:$0xff] %vm1476, %v1449
      %1485 = vst.msk [vmem:[#allocation2 + $0x40] sm:$0xff] %vm1476, %v1451
      %1486 = vst.msk [vmem:[#allocation2 + $0x48] sm:$0xff] %vm1476, %v1453
      %1487 = vst.msk [vmem:[#allocation2 + $0x50] sm:$0xff] %vm1476, %v1455
      %1488 = vst.msk [vmem:[#allocation2 + $0x58] sm:$0xff] %vm1476, %v1457
      %1489 = vst.msk [vmem:[#allocation2 + $0x60] sm:$0xff] %vm1476, %v1459
      %1490 = vst.msk [vmem:[#allocation2 + $0x68] sm:$0xff] %vm1476, %v1461
      %v1491 = vld [vmem:[%s956] sm:$0xe]
      %v1492 = vld [vmem:[%s956 + $0x4] sm:$0xf]
      %v1493 = vld [vmem:[%s956 + $0x8] sm:$0x1]
      %v1494 = vld [vmem:[%s956 + $0xc] sm:$0xe]
      %v1495 = vld [vmem:[%s956 + $0x10] sm:$0xf]
      %v1496 = vld [vmem:[%s956 + $0x14] sm:$0x1]
      %v1497 = vld [vmem:[%s956 + $0x18] sm:$0xe]
      %v1498 = vld [vmem:[%s956 + $0x1c] sm:$0xf]
      %v1499 = vld [vmem:[%s956 + $0x20] sm:$0x1]
      %v1500 = vld [vmem:[%s956 + $0x24] sm:$0xe]
      %v1501 = vld [vmem:[%s956 + $0x28] sm:$0xf]
      %v1502 = vld [vmem:[%s956 + $0x2c] sm:$0x1]
      %v1503 = vld [vmem:[%s956 + $0x30] sm:$0xe]
      %v1504 = vld [vmem:[%s956 + $0x34] sm:$0xf]
      %v1505 = vld [vmem:[%s956 + $0x38] sm:$0x1]
      %v1506 = vld [vmem:[%s956 + $0x3c] sm:$0xe]
      %v1507 = vld [vmem:[%s956 + $0x40] sm:$0xf]
      %v1508 = vld [vmem:[%s956 + $0x44] sm:$0x1]
      %v1509 = vld [vmem:[%s956 + $0x48] sm:$0xe]
      %v1510 = vld [vmem:[%s956 + $0x4c] sm:$0xf]
      %v1511 = vld [vmem:[%s956 + $0x50] sm:$0x1]
      %v1512 = vld [vmem:[%s956 + $0x54] sm:$0xe]
      %v1513 = vld [vmem:[%s956 + $0x58] sm:$0xf]
      %v1514 = vld [vmem:[%s956 + $0x5c] sm:$0x1]
      %v1515 = vld [vmem:[%s956 + $0x60] sm:$0xe]
      %v1516 = vld [vmem:[%s956 + $0x64] sm:$0xf]
      %v1517 = vld [vmem:[%s956 + $0x68] sm:$0x1]
      %v1518 = vld [vmem:[%s956 + $0x6c] sm:$0xe]
      %v1519 = vld [vmem:[%s956 + $0x70] sm:$0xf]
      %v1520 = vld [vmem:[%s956 + $0x74] sm:$0x1]
      %v1521 = vld [vmem:[%s956 + $0x78] sm:$0xe]
      %v1522 = vld [vmem:[%s956 + $0x7c] sm:$0xf]
      %v1523 = vld [vmem:[%s956 + $0x80] sm:$0x1]
      %v1524 = vld [vmem:[%s956 + $0x84] sm:$0xe]
      %v1525 = vld [vmem:[%s956 + $0x88] sm:$0xf]
      %v1526 = vld [vmem:[%s956 + $0x8c] sm:$0x1]
      %v1527 = vld [vmem:[%s956 + $0x90] sm:$0xe]
      %v1528 = vld [vmem:[%s956 + $0x94] sm:$0xf]
      %v1529 = vld [vmem:[%s956 + $0x98] sm:$0x1]
      %v1530 = vld [vmem:[%s956 + $0x9c] sm:$0xe]
      %v1531 = vld [vmem:[%s956 + $0xa0] sm:$0xf]
      %v1532 = vld [vmem:[%s956 + $0xa4] sm:$0x1]
      %v1575 = vunpack.c.l.b16 %v1491
      %v1576 = vunpack.c.l.b16 %v1492
      %v1577 = vunpack.c.l.b16 %v1493
      %v1578 = vunpack.c.l.b16 %v1494
      %v1579 = vunpack.c.l.b16 %v1495
      %v1580 = vunpack.c.l.b16 %v1496
      %v1581 = vunpack.c.l.b16 %v1497
      %v1582 = vunpack.c.l.b16 %v1498
      %v1583 = vunpack.c.l.b16 %v1499
      %v1584 = vunpack.c.l.b16 %v1500
      %v1585 = vunpack.c.l.b16 %v1501
      %v1586 = vunpack.c.l.b16 %v1502
      %v1587 = vunpack.c.l.b16 %v1503
      %v1588 = vunpack.c.l.b16 %v1504
      %v1589 = vunpack.c.l.b16 %v1505
      %v1590 = vunpack.c.l.b16 %v1506
      %v1591 = vunpack.c.l.b16 %v1507
      %v1592 = vunpack.c.l.b16 %v1508
      %v1593 = vunpack.c.l.b16 %v1509
      %v1594 = vunpack.c.l.b16 %v1510
      %v1595 = vunpack.c.l.b16 %v1511
      %v1596 = vunpack.c.l.b16 %v1512
      %v1597 = vunpack.c.l.b16 %v1513
      %v1598 = vunpack.c.l.b16 %v1514
      %v1599 = vunpack.c.l.b16 %v1515
      %v1600 = vunpack.c.l.b16 %v1516
      %v1601 = vunpack.c.l.b16 %v1517
      %v1602 = vunpack.c.l.b16 %v1518
      %v1603 = vunpack.c.l.b16 %v1519
      %v1604 = vunpack.c.l.b16 %v1520
      %v1605 = vunpack.c.l.b16 %v1521
      %v1606 = vunpack.c.l.b16 %v1522
      %v1607 = vunpack.c.l.b16 %v1523
      %v1608 = vunpack.c.l.b16 %v1524
      %v1609 = vunpack.c.l.b16 %v1525
      %v1610 = vunpack.c.l.b16 %v1526
      %v1611 = vunpack.c.l.b16 %v1527
      %v1612 = vunpack.c.l.b16 %v1528
      %v1613 = vunpack.c.l.b16 %v1529
      %v1614 = vunpack.c.l.b16 %v1530
      %v1615 = vunpack.c.l.b16 %v1531
      %v1616 = vunpack.c.l.b16 %v1532
      %v1617 = vpack.c.b16 %v1576, %v1575
      %v1618 = vpack.c.b16 %v1577, %v1577
      %v1619 = vpack.c.b16 %v1579, %v1578
      %v1620 = vpack.c.b16 %v1580, %v1580
      %v1621 = vpack.c.b16 %v1582, %v1581
      %v1622 = vpack.c.b16 %v1583, %v1583
      %v1623 = vpack.c.b16 %v1585, %v1584
      %v1624 = vpack.c.b16 %v1586, %v1586
      %v1625 = vpack.c.b16 %v1588, %v1587
      %v1626 = vpack.c.b16 %v1589, %v1589
      %v1627 = vpack.c.b16 %v1591, %v1590
      %v1628 = vpack.c.b16 %v1592, %v1592
      %v1629 = vpack.c.b16 %v1594, %v1593
      %v1630 = vpack.c.b16 %v1595, %v1595
      %v1631 = vpack.c.b16 %v1597, %v1596
      %v1632 = vpack.c.b16 %v1598, %v1598
      %v1633 = vpack.c.b16 %v1600, %v1599
      %v1634 = vpack.c.b16 %v1601, %v1601
      %v1635 = vpack.c.b16 %v1603, %v1602
      %v1636 = vpack.c.b16 %v1604, %v1604
      %v1637 = vpack.c.b16 %v1606, %v1605
      %v1638 = vpack.c.b16 %v1607, %v1607
      %v1639 = vpack.c.b16 %v1609, %v1608
      %v1640 = vpack.c.b16 %v1610, %v1610
      %v1641 = vpack.c.b16 %v1612, %v1611
      %v1642 = vpack.c.b16 %v1613, %v1613
      %v1643 = vpack.c.b16 %v1615, %v1614
      %v1644 = vpack.c.b16 %v1616, %v1616
      %v1645 = vrot.slane %v1617, 1
      %v1646 = vrot.slane %v1618, 1
      %v1647 = vsel %vm853, %v1645, %v1646
      %v1648 = vrot.slane %v1619, 1
      %v1649 = vrot.slane %v1620, 1
      %v1650 = vsel %vm853, %v1648, %v1649
      %v1651 = vrot.slane %v1621, 1
      %v1652 = vrot.slane %v1622, 1
      %v1653 = vsel %vm853, %v1651, %v1652
      %v1654 = vrot.slane %v1623, 1
      %v1655 = vrot.slane %v1624, 1
      %v1656 = vsel %vm853, %v1654, %v1655
      %v1657 = vrot.slane %v1625, 1
      %v1658 = vrot.slane %v1626, 1
      %v1659 = vsel %vm853, %v1657, %v1658
      %v1660 = vrot.slane %v1627, 1
      %v1661 = vrot.slane %v1628, 1
      %v1662 = vsel %vm853, %v1660, %v1661
      %v1663 = vrot.slane %v1629, 1
      %v1664 = vrot.slane %v1630, 1
      %v1665 = vsel %vm853, %v1663, %v1664
      %v1666 = vrot.slane %v1631, 1
      %v1667 = vrot.slane %v1632, 1
      %v1668 = vsel %vm853, %v1666, %v1667
      %v1669 = vrot.slane %v1633, 1
      %v1670 = vrot.slane %v1634, 1
      %v1671 = vsel %vm853, %v1669, %v1670
      %v1672 = vrot.slane %v1635, 1
      %v1673 = vrot.slane %v1636, 1
      %v1674 = vsel %vm853, %v1672, %v1673
      %v1675 = vrot.slane %v1637, 1
      %v1676 = vrot.slane %v1638, 1
      %v1677 = vsel %vm853, %v1675, %v1676
      %v1678 = vrot.slane %v1639, 1
      %v1679 = vrot.slane %v1640, 1
      %v1680 = vsel %vm853, %v1678, %v1679
      %v1681 = vrot.slane %v1641, 1
      %v1682 = vrot.slane %v1642, 1
      %v1683 = vsel %vm853, %v1681, %v1682
      %v1684 = vrot.slane %v1643, 1
      %v1685 = vrot.slane %v1644, 1
      %v1686 = vsel %vm853, %v1684, %v1685
      %1687 = vrot.lane.b32.xlu0 %v1647, 20
      %v1688 = vpop.permute.xlu0 %1687
      %1689 = vrot.lane.b32.xlu0 %v1650, 20
      %v1690 = vpop.permute.xlu0 %1689
      %1691 = vrot.lane.b32.xlu0 %v1653, 20
      %v1692 = vpop.permute.xlu0 %1691
      %1693 = vrot.lane.b32.xlu0 %v1656, 20
      %v1694 = vpop.permute.xlu0 %1693
      %1695 = vrot.lane.b32.xlu0 %v1659, 20
      %v1696 = vpop.permute.xlu0 %1695
      %1697 = vrot.lane.b32.xlu0 %v1662, 20
      %v1698 = vpop.permute.xlu0 %1697
      %1699 = vrot.lane.b32.xlu0 %v1665, 20
      %v1700 = vpop.permute.xlu0 %1699
      %1701 = vrot.lane.b32.xlu0 %v1668, 20
      %v1702 = vpop.permute.xlu0 %1701
      %1703 = vrot.lane.b32.xlu0 %v1671, 20
      %v1704 = vpop.permute.xlu0 %1703
      %1705 = vrot.lane.b32.xlu0 %v1674, 20
      %v1706 = vpop.permute.xlu0 %1705
      %1707 = vrot.lane.b32.xlu0 %v1677, 20
      %v1708 = vpop.permute.xlu0 %1707
      %1709 = vrot.lane.b32.xlu0 %v1680, 20
      %v1710 = vpop.permute.xlu0 %1709
      %1711 = vrot.lane.b32.xlu0 %v1683, 20
      %v1712 = vpop.permute.xlu0 %1711
      %1713 = vrot.lane.b32.xlu0 %v1686, 20
      %v1714 = vpop.permute.xlu0 %1713
      %vm1729 = vcmask 195744
      %1730 = vst.msk [vmem:[#allocation2] sm:$0xff] %vm1729, %v1688
      %1731 = vst.msk [vmem:[#allocation2 + $0x8] sm:$0xff] %vm1729, %v1690
      %1732 = vst.msk [vmem:[#allocation2 + $0x10] sm:$0xff] %vm1729, %v1692
      %1733 = vst.msk [vmem:[#allocation2 + $0x18] sm:$0xff] %vm1729, %v1694
      %1734 = vst.msk [vmem:[#allocation2 + $0x20] sm:$0xff] %vm1729, %v1696
      %1735 = vst.msk [vmem:[#allocation2 + $0x28] sm:$0xff] %vm1729, %v1698
      %1736 = vst.msk [vmem:[#allocation2 + $0x30] sm:$0xff] %vm1729, %v1700
      %1737 = vst.msk [vmem:[#allocation2 + $0x38] sm:$0xff] %vm1729, %v1702
      %1738 = vst.msk [vmem:[#allocation2 + $0x40] sm:$0xff] %vm1729, %v1704
      %1739 = vst.msk [vmem:[#allocation2 + $0x48] sm:$0xff] %vm1729, %v1706
      %1740 = vst.msk [vmem:[#allocation2 + $0x50] sm:$0xff] %vm1729, %v1708
      %1741 = vst.msk [vmem:[#allocation2 + $0x58] sm:$0xff] %vm1729, %v1710
      %1742 = vst.msk [vmem:[#allocation2 + $0x60] sm:$0xff] %vm1729, %v1712
      %1743 = vst.msk [vmem:[#allocation2 + $0x68] sm:$0xff] %vm1729, %v1714
      %s1744 = sadd.s32 %s188, 2
      %s1745 = smul.u32 %s1744, 3
      %s1746 = smul.addr %s1745, 4
      %s1747 = scalar_lea.vmem %s171, %s1746
      %v1748 = vld [vmem:[%s1747] sm:$0xf]
      %v1749 = vld [vmem:[%s1747 + $0x4] sm:$0xf]
      %v1750 = vld [vmem:[%s1747 + $0xc] sm:$0xf]
      %v1751 = vld [vmem:[%s1747 + $0x10] sm:$0xf]
      %v1752 = vld [vmem:[%s1747 + $0x18] sm:$0xf]
      %v1753 = vld [vmem:[%s1747 + $0x1c] sm:$0xf]
      %v1754 = vld [vmem:[%s1747 + $0x24] sm:$0xf]
      %v1755 = vld [vmem:[%s1747 + $0x28] sm:$0xf]
      %v1756 = vld [vmem:[%s1747 + $0x30] sm:$0xf]
      %v1757 = vld [vmem:[%s1747 + $0x34] sm:$0xf]
      %v1758 = vld [vmem:[%s1747 + $0x3c] sm:$0xf]
      %v1759 = vld [vmem:[%s1747 + $0x40] sm:$0xf]
      %v1760 = vld [vmem:[%s1747 + $0x48] sm:$0xf]
      %v1761 = vld [vmem:[%s1747 + $0x4c] sm:$0xf]
      %v1762 = vld [vmem:[%s1747 + $0x54] sm:$0xf]
      %v1763 = vld [vmem:[%s1747 + $0x58] sm:$0xf]
      %v1764 = vld [vmem:[%s1747 + $0x60] sm:$0xf]
      %v1765 = vld [vmem:[%s1747 + $0x64] sm:$0xf]
      %v1766 = vld [vmem:[%s1747 + $0x6c] sm:$0xf]
      %v1767 = vld [vmem:[%s1747 + $0x70] sm:$0xf]
      %v1768 = vld [vmem:[%s1747 + $0x78] sm:$0xf]
      %v1769 = vld [vmem:[%s1747 + $0x7c] sm:$0xf]
      %v1770 = vld [vmem:[%s1747 + $0x84] sm:$0xf]
      %v1771 = vld [vmem:[%s1747 + $0x88] sm:$0xf]
      %v1772 = vld [vmem:[%s1747 + $0x90] sm:$0xf]
      %v1773 = vld [vmem:[%s1747 + $0x94] sm:$0xf]
      %v1774 = vld [vmem:[%s1747 + $0x9c] sm:$0xf]
      %v1775 = vld [vmem:[%s1747 + $0xa0] sm:$0xf]
      %v1804 = vunpack.c.l.b16 %v1748
      %v1805 = vunpack.c.l.b16 %v1749
      %v1806 = vunpack.c.l.b16 %v1750
      %v1807 = vunpack.c.l.b16 %v1751
      %v1808 = vunpack.c.l.b16 %v1752
      %v1809 = vunpack.c.l.b16 %v1753
      %v1810 = vunpack.c.l.b16 %v1754
      %v1811 = vunpack.c.l.b16 %v1755
      %v1812 = vunpack.c.l.b16 %v1756
      %v1813 = vunpack.c.l.b16 %v1757
      %v1814 = vunpack.c.l.b16 %v1758
      %v1815 = vunpack.c.l.b16 %v1759
      %v1816 = vunpack.c.l.b16 %v1760
      %v1817 = vunpack.c.l.b16 %v1761
      %v1818 = vunpack.c.l.b16 %v1762
      %v1819 = vunpack.c.l.b16 %v1763
      %v1820 = vunpack.c.l.b16 %v1764
      %v1821 = vunpack.c.l.b16 %v1765
      %v1822 = vunpack.c.l.b16 %v1766
      %v1823 = vunpack.c.l.b16 %v1767
      %v1824 = vunpack.c.l.b16 %v1768
      %v1825 = vunpack.c.l.b16 %v1769
      %v1826 = vunpack.c.l.b16 %v1770
      %v1827 = vunpack.c.l.b16 %v1771
      %v1828 = vunpack.c.l.b16 %v1772
      %v1829 = vunpack.c.l.b16 %v1773
      %v1830 = vunpack.c.l.b16 %v1774
      %v1831 = vunpack.c.l.b16 %v1775
      %v1832 = vpack.c.b16 %v1805, %v1804
      %v1833 = vpack.c.b16 %v1807, %v1806
      %v1834 = vpack.c.b16 %v1809, %v1808
      %v1835 = vpack.c.b16 %v1811, %v1810
      %v1836 = vpack.c.b16 %v1813, %v1812
      %v1837 = vpack.c.b16 %v1815, %v1814
      %v1838 = vpack.c.b16 %v1817, %v1816
      %v1839 = vpack.c.b16 %v1819, %v1818
      %v1840 = vpack.c.b16 %v1821, %v1820
      %v1841 = vpack.c.b16 %v1823, %v1822
      %v1842 = vpack.c.b16 %v1825, %v1824
      %v1843 = vpack.c.b16 %v1827, %v1826
      %v1844 = vpack.c.b16 %v1829, %v1828
      %v1845 = vpack.c.b16 %v1831, %v1830
      %1846 = vrot.lane.b32.xlu0 %v1832, 24
      %v1847 = vpop.permute.xlu0 %1846
      %1848 = vrot.lane.b32.xlu0 %v1833, 24
      %v1849 = vpop.permute.xlu0 %1848
      %1850 = vrot.lane.b32.xlu0 %v1834, 24
      %v1851 = vpop.permute.xlu0 %1850
      %1852 = vrot.lane.b32.xlu0 %v1835, 24
      %v1853 = vpop.permute.xlu0 %1852
      %1854 = vrot.lane.b32.xlu0 %v1836, 24
      %v1855 = vpop.permute.xlu0 %1854
      %1856 = vrot.lane.b32.xlu0 %v1837, 24
      %v1857 = vpop.permute.xlu0 %1856
      %1858 = vrot.lane.b32.xlu0 %v1838, 24
      %v1859 = vpop.permute.xlu0 %1858
      %1860 = vrot.lane.b32.xlu0 %v1839, 24
      %v1861 = vpop.permute.xlu0 %1860
      %1862 = vrot.lane.b32.xlu0 %v1840, 24
      %v1863 = vpop.permute.xlu0 %1862
      %1864 = vrot.lane.b32.xlu0 %v1841, 24
      %v1865 = vpop.permute.xlu0 %1864
      %1866 = vrot.lane.b32.xlu0 %v1842, 24
      %v1867 = vpop.permute.xlu0 %1866
      %1868 = vrot.lane.b32.xlu0 %v1843, 24
      %v1869 = vpop.permute.xlu0 %1868
      %1870 = vrot.lane.b32.xlu0 %v1844, 24
      %v1871 = vpop.permute.xlu0 %1870
      %1872 = vrot.lane.b32.xlu0 %v1845, 24
      %v1873 = vpop.permute.xlu0 %1872
      %vm1888 = vcmask 228544
      %1889 = vst.msk [vmem:[#allocation2] sm:$0xff] %vm1888, %v1847
      %1890 = vst.msk [vmem:[#allocation2 + $0x8] sm:$0xff] %vm1888, %v1849
      %1891 = vst.msk [vmem:[#allocation2 + $0x10] sm:$0xff] %vm1888, %v1851
      %1892 = vst.msk [vmem:[#allocation2 + $0x18] sm:$0xff] %vm1888, %v1853
      %1893 = vst.msk [vmem:[#allocation2 + $0x20] sm:$0xff] %vm1888, %v1855
      %1894 = vst.msk [vmem:[#allocation2 + $0x28] sm:$0xff] %vm1888, %v1857
      %1895 = vst.msk [vmem:[#allocation2 + $0x30] sm:$0xff] %vm1888, %v1859
      %1896 = vst.msk [vmem:[#allocation2 + $0x38] sm:$0xff] %vm1888, %v1861
      %1897 = vst.msk [vmem:[#allocation2 + $0x40] sm:$0xff] %vm1888, %v1863
      %1898 = vst.msk [vmem:[#allocation2 + $0x48] sm:$0xff] %vm1888, %v1865
      %1899 = vst.msk [vmem:[#allocation2 + $0x50] sm:$0xff] %vm1888, %v1867
      %1900 = vst.msk [vmem:[#allocation2 + $0x58] sm:$0xff] %vm1888, %v1869
      %1901 = vst.msk [vmem:[#allocation2 + $0x60] sm:$0xff] %vm1888, %v1871
      %1902 = vst.msk [vmem:[#allocation2 + $0x68] sm:$0xff] %vm1888, %v1873
      %v1903 = vld [vmem:[%s1747] sm:$0xf]
      %v1904 = vld [vmem:[%s1747 + $0x4] sm:$0xf]
      %v1905 = vld [vmem:[%s1747 + $0x8] sm:$0x1]
      %v1906 = vld [vmem:[%s1747 + $0xc] sm:$0xf]
      %v1907 = vld [vmem:[%s1747 + $0x10] sm:$0xf]
      %v1908 = vld [vmem:[%s1747 + $0x14] sm:$0x1]
      %v1909 = vld [vmem:[%s1747 + $0x18] sm:$0xf]
      %v1910 = vld [vmem:[%s1747 + $0x1c] sm:$0xf]
      %v1911 = vld [vmem:[%s1747 + $0x20] sm:$0x1]
      %v1912 = vld [vmem:[%s1747 + $0x24] sm:$0xf]
      %v1913 = vld [vmem:[%s1747 + $0x28] sm:$0xf]
      %v1914 = vld [vmem:[%s1747 + $0x2c] sm:$0x1]
      %v1915 = vld [vmem:[%s1747 + $0x30] sm:$0xf]
      %v1916 = vld [vmem:[%s1747 + $0x34] sm:$0xf]
      %v1917 = vld [vmem:[%s1747 + $0x38] sm:$0x1]
      %v1918 = vld [vmem:[%s1747 + $0x3c] sm:$0xf]
      %v1919 = vld [vmem:[%s1747 + $0x40] sm:$0xf]
      %v1920 = vld [vmem:[%s1747 + $0x44] sm:$0x1]
      %v1921 = vld [vmem:[%s1747 + $0x48] sm:$0xf]
      %v1922 = vld [vmem:[%s1747 + $0x4c] sm:$0xf]
      %v1923 = vld [vmem:[%s1747 + $0x50] sm:$0x1]
      %v1924 = vld [vmem:[%s1747 + $0x54] sm:$0xf]
      %v1925 = vld [vmem:[%s1747 + $0x58] sm:$0xf]
      %v1926 = vld [vmem:[%s1747 + $0x5c] sm:$0x1]
      %v1927 = vld [vmem:[%s1747 + $0x60] sm:$0xf]
      %v1928 = vld [vmem:[%s1747 + $0x64] sm:$0xf]
      %v1929 = vld [vmem:[%s1747 + $0x68] sm:$0x1]
      %v1930 = vld [vmem:[%s1747 + $0x6c] sm:$0xf]
      %v1931 = vld [vmem:[%s1747 + $0x70] sm:$0xf]
      %v1932 = vld [vmem:[%s1747 + $0x74] sm:$0x1]
      %v1933 = vld [vmem:[%s1747 + $0x78] sm:$0xf]
      %v1934 = vld [vmem:[%s1747 + $0x7c] sm:$0xf]
      %v1935 = vld [vmem:[%s1747 + $0x80] sm:$0x1]
      %v1936 = vld [vmem:[%s1747 + $0x84] sm:$0xf]
      %v1937 = vld [vmem:[%s1747 + $0x88] sm:$0xf]
      %v1938 = vld [vmem:[%s1747 + $0x8c] sm:$0x1]
      %v1939 = vld [vmem:[%s1747 + $0x90] sm:$0xf]
      %v1940 = vld [vmem:[%s1747 + $0x94] sm:$0xf]
      %v1941 = vld [vmem:[%s1747 + $0x98] sm:$0x1]
      %v1942 = vld [vmem:[%s1747 + $0x9c] sm:$0xf]
      %v1943 = vld [vmem:[%s1747 + $0xa0] sm:$0xf]
      %v1944 = vld [vmem:[%s1747 + $0xa4] sm:$0x1]
      %v1987 = vunpack.c.l.b16 %v1903
      %v1988 = vunpack.c.l.b16 %v1904
      %v1989 = vunpack.c.l.b16 %v1905
      %v1990 = vunpack.c.l.b16 %v1906
      %v1991 = vunpack.c.l.b16 %v1907
      %v1992 = vunpack.c.l.b16 %v1908
      %v1993 = vunpack.c.l.b16 %v1909
      %v1994 = vunpack.c.l.b16 %v1910
      %v1995 = vunpack.c.l.b16 %v1911
      %v1996 = vunpack.c.l.b16 %v1912
      %v1997 = vunpack.c.l.b16 %v1913
      %v1998 = vunpack.c.l.b16 %v1914
      %v1999 = vunpack.c.l.b16 %v1915
      %v2000 = vunpack.c.l.b16 %v1916
      %v2001 = vunpack.c.l.b16 %v1917
      %v2002 = vunpack.c.l.b16 %v1918
      %v2003 = vunpack.c.l.b16 %v1919
      %v2004 = vunpack.c.l.b16 %v1920
      %v2005 = vunpack.c.l.b16 %v1921
      %v2006 = vunpack.c.l.b16 %v1922
      %v2007 = vunpack.c.l.b16 %v1923
      %v2008 = vunpack.c.l.b16 %v1924
      %v2009 = vunpack.c.l.b16 %v1925
      %v2010 = vunpack.c.l.b16 %v1926
      %v2011 = vunpack.c.l.b16 %v1927
      %v2012 = vunpack.c.l.b16 %v1928
      %v2013 = vunpack.c.l.b16 %v1929
      %v2014 = vunpack.c.l.b16 %v1930
      %v2015 = vunpack.c.l.b16 %v1931
      %v2016 = vunpack.c.l.b16 %v1932
      %v2017 = vunpack.c.l.b16 %v1933
      %v2018 = vunpack.c.l.b16 %v1934
      %v2019 = vunpack.c.l.b16 %v1935
      %v2020 = vunpack.c.l.b16 %v1936
      %v2021 = vunpack.c.l.b16 %v1937
      %v2022 = vunpack.c.l.b16 %v1938
      %v2023 = vunpack.c.l.b16 %v1939
      %v2024 = vunpack.c.l.b16 %v1940
      %v2025 = vunpack.c.l.b16 %v1941
      %v2026 = vunpack.c.l.b16 %v1942
      %v2027 = vunpack.c.l.b16 %v1943
      %v2028 = vunpack.c.l.b16 %v1944
      %v2029 = vpack.c.b16 %v1988, %v1987
      %v2030 = vpack.c.b16 %v1989, %v1989
      %v2031 = vpack.c.b16 %v1991, %v1990
      %v2032 = vpack.c.b16 %v1992, %v1992
      %v2033 = vpack.c.b16 %v1994, %v1993
      %v2034 = vpack.c.b16 %v1995, %v1995
      %v2035 = vpack.c.b16 %v1997, %v1996
      %v2036 = vpack.c.b16 %v1998, %v1998
      %v2037 = vpack.c.b16 %v2000, %v1999
      %v2038 = vpack.c.b16 %v2001, %v2001
      %v2039 = vpack.c.b16 %v2003, %v2002
      %v2040 = vpack.c.b16 %v2004, %v2004
      %v2041 = vpack.c.b16 %v2006, %v2005
      %v2042 = vpack.c.b16 %v2007, %v2007
      %v2043 = vpack.c.b16 %v2009, %v2008
      %v2044 = vpack.c.b16 %v2010, %v2010
      %v2045 = vpack.c.b16 %v2012, %v2011
      %v2046 = vpack.c.b16 %v2013, %v2013
      %v2047 = vpack.c.b16 %v2015, %v2014
      %v2048 = vpack.c.b16 %v2016, %v2016
      %v2049 = vpack.c.b16 %v2018, %v2017
      %v2050 = vpack.c.b16 %v2019, %v2019
      %v2051 = vpack.c.b16 %v2021, %v2020
      %v2052 = vpack.c.b16 %v2022, %v2022
      %v2053 = vpack.c.b16 %v2024, %v2023
      %v2054 = vpack.c.b16 %v2025, %v2025
      %v2055 = vpack.c.b16 %v2027, %v2026
      %v2056 = vpack.c.b16 %v2028, %v2028
      %v2058 = vshrl.u32 %v2029, 16
      %v2060 = vshll.u32 %v2029, 16
      %v2062 = vrot.slane %v2060, 1
      %v2063 = vor.u32 %v2058, %v2062
      %v2065 = vshll.u32 %v2030, 16
      %v2067 = vrot.slane %v2065, 1
      %v2068 = vsel %vm473, %v2063, %v2067
      %v2070 = vshrl.u32 %v2031, 16
      %v2072 = vshll.u32 %v2031, 16
      %v2074 = vrot.slane %v2072, 1
      %v2075 = vor.u32 %v2070, %v2074
      %v2077 = vshll.u32 %v2032, 16
      %v2079 = vrot.slane %v2077, 1
      %v2080 = vsel %vm473, %v2075, %v2079
      %v2082 = vshrl.u32 %v2033, 16
      %v2084 = vshll.u32 %v2033, 16
      %v2086 = vrot.slane %v2084, 1
      %v2087 = vor.u32 %v2082, %v2086
      %v2089 = vshll.u32 %v2034, 16
      %v2091 = vrot.slane %v2089, 1
      %v2092 = vsel %vm473, %v2087, %v2091
      %v2094 = vshrl.u32 %v2035, 16
      %v2096 = vshll.u32 %v2035, 16
      %v2098 = vrot.slane %v2096, 1
      %v2099 = vor.u32 %v2094, %v2098
      %v2101 = vshll.u32 %v2036, 16
      %v2103 = vrot.slane %v2101, 1
      %v2104 = vsel %vm473, %v2099, %v2103
      %v2106 = vshrl.u32 %v2037, 16
      %v2108 = vshll.u32 %v2037, 16
      %v2110 = vrot.slane %v2108, 1
      %v2111 = vor.u32 %v2106, %v2110
      %v2113 = vshll.u32 %v2038, 16
      %v2115 = vrot.slane %v2113, 1
      %v2116 = vsel %vm473, %v2111, %v2115
      %v2118 = vshrl.u32 %v2039, 16
      %v2120 = vshll.u32 %v2039, 16
      %v2122 = vrot.slane %v2120, 1
      %v2123 = vor.u32 %v2118, %v2122
      %v2125 = vshll.u32 %v2040, 16
      %v2127 = vrot.slane %v2125, 1
      %v2128 = vsel %vm473, %v2123, %v2127
      %v2130 = vshrl.u32 %v2041, 16
      %v2132 = vshll.u32 %v2041, 16
      %v2134 = vrot.slane %v2132, 1
      %v2135 = vor.u32 %v2130, %v2134
      %v2137 = vshll.u32 %v2042, 16
      %v2139 = vrot.slane %v2137, 1
      %v2140 = vsel %vm473, %v2135, %v2139
      %v2142 = vshrl.u32 %v2043, 16
      %v2144 = vshll.u32 %v2043, 16
      %v2146 = vrot.slane %v2144, 1
      %v2147 = vor.u32 %v2142, %v2146
      %v2149 = vshll.u32 %v2044, 16
      %v2151 = vrot.slane %v2149, 1
      %v2152 = vsel %vm473, %v2147, %v2151
      %v2154 = vshrl.u32 %v2045, 16
      %v2156 = vshll.u32 %v2045, 16
      %v2158 = vrot.slane %v2156, 1
      %v2159 = vor.u32 %v2154, %v2158
      %v2161 = vshll.u32 %v2046, 16
      %v2163 = vrot.slane %v2161, 1
      %v2164 = vsel %vm473, %v2159, %v2163
      %v2166 = vshrl.u32 %v2047, 16
      %v2168 = vshll.u32 %v2047, 16
      %v2170 = vrot.slane %v2168, 1
      %v2171 = vor.u32 %v2166, %v2170
      %v2173 = vshll.u32 %v2048, 16
      %v2175 = vrot.slane %v2173, 1
      %v2176 = vsel %vm473, %v2171, %v2175
      %v2178 = vshrl.u32 %v2049, 16
      %v2180 = vshll.u32 %v2049, 16
      %v2182 = vrot.slane %v2180, 1
      %v2183 = vor.u32 %v2178, %v2182
      %v2185 = vshll.u32 %v2050, 16
      %v2187 = vrot.slane %v2185, 1
      %v2188 = vsel %vm473, %v2183, %v2187
      %v2190 = vshrl.u32 %v2051, 16
      %v2192 = vshll.u32 %v2051, 16
      %v2194 = vrot.slane %v2192, 1
      %v2195 = vor.u32 %v2190, %v2194
      %v2197 = vshll.u32 %v2052, 16
      %v2199 = vrot.slane %v2197, 1
      %v2200 = vsel %vm473, %v2195, %v2199
      %v2202 = vshrl.u32 %v2053, 16
      %v2204 = vshll.u32 %v2053, 16
      %v2206 = vrot.slane %v2204, 1
      %v2207 = vor.u32 %v2202, %v2206
      %v2209 = vshll.u32 %v2054, 16
      %v2211 = vrot.slane %v2209, 1
      %v2212 = vsel %vm473, %v2207, %v2211
      %v2214 = vshrl.u32 %v2055, 16
      %v2216 = vshll.u32 %v2055, 16
      %v2218 = vrot.slane %v2216, 1
      %v2219 = vor.u32 %v2214, %v2218
      %v2221 = vshll.u32 %v2056, 16
      %v2223 = vrot.slane %v2221, 1
      %v2224 = vsel %vm473, %v2219, %v2223
      %2225 = vrot.lane.b32.xlu0 %v2068, 28
      %v2226 = vpop.permute.xlu0 %2225
      %2227 = vrot.lane.b32.xlu0 %v2080, 28
      %v2228 = vpop.permute.xlu0 %2227
      %2229 = vrot.lane.b32.xlu0 %v2092, 28
      %v2230 = vpop.permute.xlu0 %2229
      %2231 = vrot.lane.b32.xlu0 %v2104, 28
      %v2232 = vpop.permute.xlu0 %2231
      %2233 = vrot.lane.b32.xlu0 %v2116, 28
      %v2234 = vpop.permute.xlu0 %2233
      %2235 = vrot.lane.b32.xlu0 %v2128, 28
      %v2236 = vpop.permute.xlu0 %2235
      %2237 = vrot.lane.b32.xlu0 %v2140, 28
      %v2238 = vpop.permute.xlu0 %2237
      %2239 = vrot.lane.b32.xlu0 %v2152, 28
      %v2240 = vpop.permute.xlu0 %2239
      %2241 = vrot.lane.b32.xlu0 %v2164, 28
      %v2242 = vpop.permute.xlu0 %2241
      %2243 = vrot.lane.b32.xlu0 %v2176, 28
      %v2244 = vpop.permute.xlu0 %2243
      %2245 = vrot.lane.b32.xlu0 %v2188, 28
      %v2246 = vpop.permute.xlu0 %2245
      %2247 = vrot.lane.b32.xlu0 %v2200, 28
      %v2248 = vpop.permute.xlu0 %2247
      %2249 = vrot.lane.b32.xlu0 %v2212, 28
      %v2250 = vpop.permute.xlu0 %2249
      %2251 = vrot.lane.b32.xlu0 %v2224, 28
      %v2252 = vpop.permute.xlu0 %2251
      %vm2267 = vcmask 261344
      %2268 = vst.msk [vmem:[#allocation2] sm:$0xff] %vm2267, %v2226
      %2269 = vst.msk [vmem:[#allocation2 + $0x8] sm:$0xff] %vm2267, %v2228
      %2270 = vst.msk [vmem:[#allocation2 + $0x10] sm:$0xff] %vm2267, %v2230
      %2271 = vst.msk [vmem:[#allocation2 + $0x18] sm:$0xff] %vm2267, %v2232
      %2272 = vst.msk [vmem:[#allocation2 + $0x20] sm:$0xff] %vm2267, %v2234
      %2273 = vst.msk [vmem:[#allocation2 + $0x28] sm:$0xff] %vm2267, %v2236
      %2274 = vst.msk [vmem:[#allocation2 + $0x30] sm:$0xff] %vm2267, %v2238
      %2275 = vst.msk [vmem:[#allocation2 + $0x38] sm:$0xff] %vm2267, %v2240
      %2276 = vst.msk [vmem:[#allocation2 + $0x40] sm:$0xff] %vm2267, %v2242
      %2277 = vst.msk [vmem:[#allocation2 + $0x48] sm:$0xff] %vm2267, %v2244
      %2278 = vst.msk [vmem:[#allocation2 + $0x50] sm:$0xff] %vm2267, %v2246
      %2279 = vst.msk [vmem:[#allocation2 + $0x58] sm:$0xff] %vm2267, %v2248
      %2280 = vst.msk [vmem:[#allocation2 + $0x60] sm:$0xff] %vm2267, %v2250
      %2281 = vst.msk [vmem:[#allocation2 + $0x68] sm:$0xff] %vm2267, %v2252
      %v2282 = vld [vmem:[%s1747] sm:$0xe]
      %v2283 = vld [vmem:[%s1747 + $0x4] sm:$0xf]
      %v2284 = vld [vmem:[%s1747 + $0x8] sm:$0x1]
      %v2285 = vld [vmem:[%s1747 + $0xc] sm:$0xe]
      %v2286 = vld [vmem:[%s1747 + $0x10] sm:$0xf]
      %v2287 = vld [vmem:[%s1747 + $0x14] sm:$0x1]
      %v2288 = vld [vmem:[%s1747 + $0x18] sm:$0xe]
      %v2289 = vld [vmem:[%s1747 + $0x1c] sm:$0xf]
      %v2290 = vld [vmem:[%s1747 + $0x20] sm:$0x1]
      %v2291 = vld [vmem:[%s1747 + $0x24] sm:$0xe]
      %v2292 = vld [vmem:[%s1747 + $0x28] sm:$0xf]
      %v2293 = vld [vmem:[%s1747 + $0x2c] sm:$0x1]
      %v2294 = vld [vmem:[%s1747 + $0x30] sm:$0xe]
      %v2295 = vld [vmem:[%s1747 + $0x34] sm:$0xf]
      %v2296 = vld [vmem:[%s1747 + $0x38] sm:$0x1]
      %v2297 = vld [vmem:[%s1747 + $0x3c] sm:$0xe]
      %v2298 = vld [vmem:[%s1747 + $0x40] sm:$0xf]
      %v2299 = vld [vmem:[%s1747 + $0x44] sm:$0x1]
      %v2300 = vld [vmem:[%s1747 + $0x48] sm:$0xe]
      %v2301 = vld [vmem:[%s1747 + $0x4c] sm:$0xf]
      %v2302 = vld [vmem:[%s1747 + $0x50] sm:$0x1]
      %v2303 = vld [vmem:[%s1747 + $0x54] sm:$0xe]
      %v2304 = vld [vmem:[%s1747 + $0x58] sm:$0xf]
      %v2305 = vld [vmem:[%s1747 + $0x5c] sm:$0x1]
      %v2306 = vld [vmem:[%s1747 + $0x60] sm:$0xe]
      %v2307 = vld [vmem:[%s1747 + $0x64] sm:$0xf]
      %v2308 = vld [vmem:[%s1747 + $0x68] sm:$0x1]
      %v2309 = vld [vmem:[%s1747 + $0x6c] sm:$0xe]
      %v2310 = vld [vmem:[%s1747 + $0x70] sm:$0xf]
      %v2311 = vld [vmem:[%s1747 + $0x74] sm:$0x1]
      %v2312 = vld [vmem:[%s1747 + $0x78] sm:$0xe]
      %v2313 = vld [vmem:[%s1747 + $0x7c] sm:$0xf]
      %v2314 = vld [vmem:[%s1747 + $0x80] sm:$0x1]
      %v2315 = vld [vmem:[%s1747 + $0x84] sm:$0xe]
      %v2316 = vld [vmem:[%s1747 + $0x88] sm:$0xf]
      %v2317 = vld [vmem:[%s1747 + $0x8c] sm:$0x1]
      %v2318 = vld [vmem:[%s1747 + $0x90] sm:$0xe]
      %v2319 = vld [vmem:[%s1747 + $0x94] sm:$0xf]
      %v2320 = vld [vmem:[%s1747 + $0x98] sm:$0x1]
      %v2321 = vld [vmem:[%s1747 + $0x9c] sm:$0xe]
      %v2322 = vld [vmem:[%s1747 + $0xa0] sm:$0xf]
      %v2323 = vld [vmem:[%s1747 + $0xa4] sm:$0x1]
      %v2366 = vunpack.c.l.b16 %v2282
      %v2367 = vunpack.c.l.b16 %v2283
      %v2368 = vunpack.c.l.b16 %v2284
      %v2369 = vunpack.c.l.b16 %v2285
      %v2370 = vunpack.c.l.b16 %v2286
      %v2371 = vunpack.c.l.b16 %v2287
      %v2372 = vunpack.c.l.b16 %v2288
      %v2373 = vunpack.c.l.b16 %v2289
      %v2374 = vunpack.c.l.b16 %v2290
      %v2375 = vunpack.c.l.b16 %v2291
      %v2376 = vunpack.c.l.b16 %v2292
      %v2377 = vunpack.c.l.b16 %v2293
      %v2378 = vunpack.c.l.b16 %v2294
      %v2379 = vunpack.c.l.b16 %v2295
      %v2380 = vunpack.c.l.b16 %v2296
      %v2381 = vunpack.c.l.b16 %v2297
      %v2382 = vunpack.c.l.b16 %v2298
      %v2383 = vunpack.c.l.b16 %v2299
      %v2384 = vunpack.c.l.b16 %v2300
      %v2385 = vunpack.c.l.b16 %v2301
      %v2386 = vunpack.c.l.b16 %v2302
      %v2387 = vunpack.c.l.b16 %v2303
      %v2388 = vunpack.c.l.b16 %v2304
      %v2389 = vunpack.c.l.b16 %v2305
      %v2390 = vunpack.c.l.b16 %v2306
      %v2391 = vunpack.c.l.b16 %v2307
      %v2392 = vunpack.c.l.b16 %v2308
      %v2393 = vunpack.c.l.b16 %v2309
      %v2394 = vunpack.c.l.b16 %v2310
      %v2395 = vunpack.c.l.b16 %v2311
      %v2396 = vunpack.c.l.b16 %v2312
      %v2397 = vunpack.c.l.b16 %v2313
      %v2398 = vunpack.c.l.b16 %v2314
      %v2399 = vunpack.c.l.b16 %v2315
      %v2400 = vunpack.c.l.b16 %v2316
      %v2401 = vunpack.c.l.b16 %v2317
      %v2402 = vunpack.c.l.b16 %v2318
      %v2403 = vunpack.c.l.b16 %v2319
      %v2404 = vunpack.c.l.b16 %v2320
      %v2405 = vunpack.c.l.b16 %v2321
      %v2406 = vunpack.c.l.b16 %v2322
      %v2407 = vunpack.c.l.b16 %v2323
      %v2408 = vpack.c.b16 %v2367, %v2366
      %v2409 = vpack.c.b16 %v2368, %v2368
      %v2410 = vpack.c.b16 %v2370, %v2369
      %v2411 = vpack.c.b16 %v2371, %v2371
      %v2412 = vpack.c.b16 %v2373, %v2372
      %v2413 = vpack.c.b16 %v2374, %v2374
      %v2414 = vpack.c.b16 %v2376, %v2375
      %v2415 = vpack.c.b16 %v2377, %v2377
      %v2416 = vpack.c.b16 %v2379, %v2378
      %v2417 = vpack.c.b16 %v2380, %v2380
      %v2418 = vpack.c.b16 %v2382, %v2381
      %v2419 = vpack.c.b16 %v2383, %v2383
      %v2420 = vpack.c.b16 %v2385, %v2384
      %v2421 = vpack.c.b16 %v2386, %v2386
      %v2422 = vpack.c.b16 %v2388, %v2387
      %v2423 = vpack.c.b16 %v2389, %v2389
      %v2424 = vpack.c.b16 %v2391, %v2390
      %v2425 = vpack.c.b16 %v2392, %v2392
      %v2426 = vpack.c.b16 %v2394, %v2393
      %v2427 = vpack.c.b16 %v2395, %v2395
      %v2428 = vpack.c.b16 %v2397, %v2396
      %v2429 = vpack.c.b16 %v2398, %v2398
      %v2430 = vpack.c.b16 %v2400, %v2399
      %v2431 = vpack.c.b16 %v2401, %v2401
      %v2432 = vpack.c.b16 %v2403, %v2402
      %v2433 = vpack.c.b16 %v2404, %v2404
      %v2434 = vpack.c.b16 %v2406, %v2405
      %v2435 = vpack.c.b16 %v2407, %v2407
      %v2436 = vrot.slane %v2408, 1
      %v2437 = vrot.slane %v2409, 1
      %v2438 = vsel %vm853, %v2436, %v2437
      %v2439 = vrot.slane %v2410, 1
      %v2440 = vrot.slane %v2411, 1
      %v2441 = vsel %vm853, %v2439, %v2440
      %v2442 = vrot.slane %v2412, 1
      %v2443 = vrot.slane %v2413, 1
      %v2444 = vsel %vm853, %v2442, %v2443
      %v2445 = vrot.slane %v2414, 1
      %v2446 = vrot.slane %v2415, 1
      %v2447 = vsel %vm853, %v2445, %v2446
      %v2448 = vrot.slane %v2416, 1
      %v2449 = vrot.slane %v2417, 1
      %v2450 = vsel %vm853, %v2448, %v2449
      %v2451 = vrot.slane %v2418, 1
      %v2452 = vrot.slane %v2419, 1
      %v2453 = vsel %vm853, %v2451, %v2452
      %v2454 = vrot.slane %v2420, 1
      %v2455 = vrot.slane %v2421, 1
      %v2456 = vsel %vm853, %v2454, %v2455
      %v2457 = vrot.slane %v2422, 1
      %v2458 = vrot.slane %v2423, 1
      %v2459 = vsel %vm853, %v2457, %v2458
      %v2460 = vrot.slane %v2424, 1
      %v2461 = vrot.slane %v2425, 1
      %v2462 = vsel %vm853, %v2460, %v2461
      %v2463 = vrot.slane %v2426, 1
      %v2464 = vrot.slane %v2427, 1
      %v2465 = vsel %vm853, %v2463, %v2464
      %v2466 = vrot.slane %v2428, 1
      %v2467 = vrot.slane %v2429, 1
      %v2468 = vsel %vm853, %v2466, %v2467
      %v2469 = vrot.slane %v2430, 1
      %v2470 = vrot.slane %v2431, 1
      %v2471 = vsel %vm853, %v2469, %v2470
      %v2472 = vrot.slane %v2432, 1
      %v2473 = vrot.slane %v2433, 1
      %v2474 = vsel %vm853, %v2472, %v2473
      %v2475 = vrot.slane %v2434, 1
      %v2476 = vrot.slane %v2435, 1
      %v2477 = vsel %vm853, %v2475, %v2476
      %2478 = vrot.lane.b32.xlu0 %v2438, 32
      %v2479 = vpop.permute.xlu0 %2478
      %2480 = vrot.lane.b32.xlu0 %v2441, 32
      %v2481 = vpop.permute.xlu0 %2480
      %2482 = vrot.lane.b32.xlu0 %v2444, 32
      %v2483 = vpop.permute.xlu0 %2482
      %2484 = vrot.lane.b32.xlu0 %v2447, 32
      %v2485 = vpop.permute.xlu0 %2484
      %2486 = vrot.lane.b32.xlu0 %v2450, 32
      %v2487 = vpop.permute.xlu0 %2486
      %2488 = vrot.lane.b32.xlu0 %v2453, 32
      %v2489 = vpop.permute.xlu0 %2488
      %2490 = vrot.lane.b32.xlu0 %v2456, 32
      %v2491 = vpop.permute.xlu0 %2490
      %2492 = vrot.lane.b32.xlu0 %v2459, 32
      %v2493 = vpop.permute.xlu0 %2492
      %2494 = vrot.lane.b32.xlu0 %v2462, 32
      %v2495 = vpop.permute.xlu0 %2494
      %2496 = vrot.lane.b32.xlu0 %v2465, 32
      %v2497 = vpop.permute.xlu0 %2496
      %2498 = vrot.lane.b32.xlu0 %v2468, 32
      %v2499 = vpop.permute.xlu0 %2498
      %2500 = vrot.lane.b32.xlu0 %v2471, 32
      %v2501 = vpop.permute.xlu0 %2500
      %2502 = vrot.lane.b32.xlu0 %v2474, 32
      %v2503 = vpop.permute.xlu0 %2502
      %2504 = vrot.lane.b32.xlu0 %v2477, 32
      %v2505 = vpop.permute.xlu0 %2504
      %vm2520 = vcmask 294144
      %2521 = vst.msk [vmem:[#allocation2] sm:$0xff] %vm2520, %v2479
      %2522 = vst.msk [vmem:[#allocation2 + $0x8] sm:$0xff] %vm2520, %v2481
      %2523 = vst.msk [vmem:[#allocation2 + $0x10] sm:$0xff] %vm2520, %v2483
      %2524 = vst.msk [vmem:[#allocation2 + $0x18] sm:$0xff] %vm2520, %v2485
      %2525 = vst.msk [vmem:[#allocation2 + $0x20] sm:$0xff] %vm2520, %v2487
      %2526 = vst.msk [vmem:[#allocation2 + $0x28] sm:$0xff] %vm2520, %v2489
      %2527 = vst.msk [vmem:[#allocation2 + $0x30] sm:$0xff] %vm2520, %v2491
      %2528 = vst.msk [vmem:[#allocation2 + $0x38] sm:$0xff] %vm2520, %v2493
      %2529 = vst.msk [vmem:[#allocation2 + $0x40] sm:$0xff] %vm2520, %v2495
      %2530 = vst.msk [vmem:[#allocation2 + $0x48] sm:$0xff] %vm2520, %v2497
      %2531 = vst.msk [vmem:[#allocation2 + $0x50] sm:$0xff] %vm2520, %v2499
      %2532 = vst.msk [vmem:[#allocation2 + $0x58] sm:$0xff] %vm2520, %v2501
      %2533 = vst.msk [vmem:[#allocation2 + $0x60] sm:$0xff] %vm2520, %v2503
      %2534 = vst.msk [vmem:[#allocation2 + $0x68] sm:$0xff] %vm2520, %v2505
      %v2535 = vld [vmem:[#allocation2] sm:$0xff]
      %v2536 = vld [vmem:[#allocation2 + $0x8] sm:$0xff]
      %v2537 = vld [vmem:[#allocation2 + $0x10] sm:$0xff]
      %v2538 = vld [vmem:[#allocation2 + $0x18] sm:$0xff]
      %v2539 = vld [vmem:[#allocation2 + $0x20] sm:$0xff]
      %v2540 = vld [vmem:[#allocation2 + $0x28] sm:$0xff]
      %v2541 = vld [vmem:[#allocation2 + $0x30] sm:$0xff]
      %v2542 = vld [vmem:[#allocation2 + $0x38] sm:$0xff]
      %v2543 = vld [vmem:[#allocation2 + $0x40] sm:$0xff]
      %v2544 = vld [vmem:[#allocation2 + $0x48] sm:$0xff]
      %v2545 = vld [vmem:[#allocation2 + $0x50] sm:$0xff]
      %v2546 = vld [vmem:[#allocation2 + $0x58] sm:$0xff]
      %v2547 = vld [vmem:[#allocation2 + $0x60] sm:$0xff]
      %v2548 = vld [vmem:[#allocation2 + $0x68] sm:$0xff]
      %v2549 = vld [vmem:[%s176] sm:$0xf]
      %v2550 = vld [vmem:[%s176 + $0x4] sm:$0xf]
      %v2551 = vld [vmem:[%s176 + $0x8] sm:$0xf]
      %v2552 = vld [vmem:[%s176 + $0xc] sm:$0xf]
      %v2553 = vld [vmem:[%s176 + $0x10] sm:$0x3]
      %v2559 = vunpack.c.l.b16 %v2549
      %v2560 = vunpack.c.l.b16 %v2550
      %v2561 = vunpack.c.l.b16 %v2551
      %v2562 = vunpack.c.l.b16 %v2552
      %v2563 = vunpack.c.l.b16 %v2553
      %v2564 = vpack.c.b16 %v2560, %v2559
      %v2565 = vpack.c.b16 %v2562, %v2561
      %v2566 = vpack.c.b16 %v2563, %v2563
      %vm2569 = vcmask 293888
      %v2571 = vsel %vm2569, %v2535, 0
      %v2574 = vsel %vm2569, %v2536, 0
      %v2577 = vsel %vm2569, %v2537, 0
      %v2580 = vsel %vm2569, %v2538, 0
      %v2583 = vsel %vm2569, %v2539, 0
      %v2586 = vsel %vm2569, %v2540, 0
      %v2589 = vsel %vm2569, %v2541, 0
      %v2592 = vsel %vm2569, %v2542, 0
      %v2595 = vsel %vm2569, %v2543, 0
      %v2598 = vsel %vm2569, %v2544, 0
      %v2601 = vsel %vm2569, %v2545, 0
      %v2604 = vsel %vm2569, %v2546, 0
      %v2607 = vsel %vm2569, %v2547, 0
      %v2610 = vsel %vm2569, %v2548, 0
      %vm2612 = vcmask 1041408
      %v2614 = vsel %vm2612, %v2566, 0
      %2616 = vmatprep.subr.bf16.mxu0 0
      %2617 = vmatpush1.bf16.msra.mxu0 %v2564
      %2618 = vmatprep.subr.bf16.mxu0 0
      %2619 = vmatpush1.bf16.msra.mxu0 %v2565
      %2620 = vmatprep.subr.bf16.mxu0 0
      %2621 = vmatpush1.bf16.msra.mxu0 %v2614
      %2622 = vmatprep.subr.bf16.mxu0 0
      %2623 = vmatpush1.bf16.msra.mxu0 0
      %2624 = vmatprep.subr.bf16.mxu0 0
      %2625 = vmatpush1.bf16.msra.mxu0 0
      %2626 = vmatprep.subr.bf16.mxu0 0
      %2627 = vmatpush1.bf16.msra.mxu0 0
      %2628 = vmatprep.subr.bf16.mxu0 0
      %2629 = vmatpush1.bf16.msra.mxu0 0
      %2630 = vmatprep.subr.bf16.mxu0 0
      %2631 = vmatpush1.bf16.msra.mxu0 0
      %2632 = vmatprep.subr.bf16.mxu0 0
      %2633 = vmatpush1.bf16.msra.mxu0 0
      %2634 = vmatprep.subr.bf16.mxu0 0
      %2635 = vmatpush1.bf16.msra.mxu0 0
      %2636 = vmatprep.subr.bf16.mxu0 0
      %2637 = vmatpush1.bf16.msra.mxu0 0
      %2638 = vmatprep.subr.bf16.mxu0 0
      %2639 = vmatpush1.bf16.msra.mxu0 0
      %2640 = vmatprep.subr.bf16.mxu0 0
      %2641 = vmatpush1.bf16.msra.mxu0 0
      %2642 = vmatprep.subr.bf16.mxu0 0
      %2643 = vmatpush1.bf16.msra.mxu0 0
      %2644 = vmatprep.subr.bf16.mxu0 0
      %2645 = vmatpush1.bf16.msra.mxu0 0
      %2646 = vmatprep.subr.bf16.mxu0 0
      %2647 = vmatpush1.bf16.msra.mxu0 0
      %2648 = vmatprep.mubr.bf16.mxu0 0
      %2649 = vmatmul.mubr.bf16.gmra.mrb[0].mxu0 %v2571
      %v2650 = vpop.f32.mrb[0].mxu0
      %v2651 = vadd.f32 0.0, %v2650
      %v2652 = vpop.f32.mrb[0].mxu0
      %v2653 = vpop.f32.mrb[0].mxu0
      %v2654 = vadd.f32 0.0, %v2653
      %v2655 = vpop.f32.mrb[0].mxu0
      %2656 = vmatprep.mubr.bf16.mxu0 0
      %2657 = vmatmul.mubr.bf16.gmra.mrb[0].mxu0 %v2574
      %v2658 = vpop.f32.mrb[0].mxu0
      %v2659 = vadd.f32 0.0, %v2658
      %v2660 = vpop.f32.mrb[0].mxu0
      %v2661 = vpop.f32.mrb[0].mxu0
      %v2662 = vadd.f32 0.0, %v2661
      %v2663 = vpop.f32.mrb[0].mxu0
      %2664 = vmatprep.mubr.bf16.mxu0 0
      %2665 = vmatmul.mubr.bf16.gmra.mrb[0].mxu0 %v2577
      %v2666 = vpop.f32.mrb[0].mxu0
      %v2667 = vadd.f32 0.0, %v2666
      %v2668 = vpop.f32.mrb[0].mxu0
      %v2669 = vpop.f32.mrb[0].mxu0
      %v2670 = vadd.f32 0.0, %v2669
      %v2671 = vpop.f32.mrb[0].mxu0
      %2672 = vmatprep.mubr.bf16.mxu0 0
      %2673 = vmatmul.mubr.bf16.gmra.mrb[0].mxu0 %v2580
      %v2674 = vpop.f32.mrb[0].mxu0
      %v2675 = vadd.f32 0.0, %v2674
      %v2676 = vpop.f32.mrb[0].mxu0
      %v2677 = vpop.f32.mrb[0].mxu0
      %v2678 = vadd.f32 0.0, %v2677
      %v2679 = vpop.f32.mrb[0].mxu0
      %2680 = vmatprep.mubr.bf16.mxu0 0
      %2681 = vmatmul.mubr.bf16.gmra.mrb[0].mxu0 %v2583
      %v2682 = vpop.f32.mrb[0].mxu0
      %v2683 = vadd.f32 0.0, %v2682
      %v2684 = vpop.f32.mrb[0].mxu0
      %v2685 = vpop.f32.mrb[0].mxu0
      %v2686 = vadd.f32 0.0, %v2685
      %v2687 = vpop.f32.mrb[0].mxu0
      %2688 = vmatprep.mubr.bf16.mxu0 0
      %2689 = vmatmul.mubr.bf16.gmra.mrb[0].mxu0 %v2586
      %v2690 = vpop.f32.mrb[0].mxu0
      %v2691 = vadd.f32 0.0, %v2690
      %v2692 = vpop.f32.mrb[0].mxu0
      %v2693 = vpop.f32.mrb[0].mxu0
      %v2694 = vadd.f32 0.0, %v2693
      %v2695 = vpop.f32.mrb[0].mxu0
      %2696 = vmatprep.mubr.bf16.mxu0 0
      %2697 = vmatmul.mubr.bf16.gmra.mrb[0].mxu0 %v2589
      %v2698 = vpop.f32.mrb[0].mxu0
      %v2699 = vadd.f32 0.0, %v2698
      %v2700 = vpop.f32.mrb[0].mxu0
      %v2701 = vpop.f32.mrb[0].mxu0
      %v2702 = vadd.f32 0.0, %v2701
      %v2703 = vpop.f32.mrb[0].mxu0
      %2704 = vmatprep.mubr.bf16.mxu0 0
      %2705 = vmatmul.mubr.bf16.gmra.mrb[0].mxu0 %v2592
      %v2706 = vpop.f32.mrb[0].mxu0
      %v2707 = vadd.f32 0.0, %v2706
      %v2708 = vpop.f32.mrb[0].mxu0
      %v2709 = vpop.f32.mrb[0].mxu0
      %v2710 = vadd.f32 0.0, %v2709
      %v2711 = vpop.f32.mrb[0].mxu0
      %2712 = vmatprep.mubr.bf16.mxu0 0
      %2713 = vmatmul.mubr.bf16.gmra.mrb[0].mxu0 %v2595
      %v2714 = vpop.f32.mrb[0].mxu0
      %v2715 = vadd.f32 0.0, %v2714
      %v2716 = vpop.f32.mrb[0].mxu0
      %v2717 = vpop.f32.mrb[0].mxu0
      %v2718 = vadd.f32 0.0, %v2717
      %v2719 = vpop.f32.mrb[0].mxu0
      %2720 = vmatprep.mubr.bf16.mxu0 0
      %2721 = vmatmul.mubr.bf16.gmra.mrb[0].mxu0 %v2598
      %v2722 = vpop.f32.mrb[0].mxu0
      %v2723 = vadd.f32 0.0, %v2722
      %v2724 = vpop.f32.mrb[0].mxu0
      %v2725 = vpop.f32.mrb[0].mxu0
      %v2726 = vadd.f32 0.0, %v2725
      %v2727 = vpop.f32.mrb[0].mxu0
      %2728 = vmatprep.mubr.bf16.mxu0 0
      %2729 = vmatmul.mubr.bf16.gmra.mrb[0].mxu0 %v2601
      %v2730 = vpop.f32.mrb[0].mxu0
      %v2731 = vadd.f32 0.0, %v2730
      %v2732 = vpop.f32.mrb[0].mxu0
      %v2733 = vpop.f32.mrb[0].mxu0
      %v2734 = vadd.f32 0.0, %v2733
      %v2735 = vpop.f32.mrb[0].mxu0
      %2736 = vmatprep.mubr.bf16.mxu0 0
      %2737 = vmatmul.mubr.bf16.gmra.mrb[0].mxu0 %v2604
      %v2738 = vpop.f32.mrb[0].mxu0
      %v2739 = vadd.f32 0.0, %v2738
      %v2740 = vpop.f32.mrb[0].mxu0
      %v2741 = vpop.f32.mrb[0].mxu0
      %v2742 = vadd.f32 0.0, %v2741
      %v2743 = vpop.f32.mrb[0].mxu0
      %2744 = vmatprep.mubr.bf16.mxu0 0
      %2745 = vmatmul.mubr.bf16.gmra.mrb[0].mxu0 %v2607
      %v2746 = vpop.f32.mrb[0].mxu0
      %v2747 = vadd.f32 0.0, %v2746
      %v2748 = vpop.f32.mrb[0].mxu0
      %v2749 = vpop.f32.mrb[0].mxu0
      %v2750 = vadd.f32 0.0, %v2749
      %v2751 = vpop.f32.mrb[0].mxu0
      %2752 = vmatprep.mubr.bf16.mxu0 0
      %2753 = vmatmul.mubr.bf16.gmra.mrb[0].mxu0 %v2610
      %v2754 = vpop.f32.mrb[0].mxu0
      %v2755 = vadd.f32 0.0, %v2754
      %v2756 = vpop.f32.mrb[0].mxu0
      %v2757 = vpop.f32.mrb[0].mxu0
      %v2758 = vadd.f32 0.0, %v2757
      %v2759 = vpop.f32.mrb[0].mxu0
      %2760 = vdwg.mxu0
      %v2761 = vpack.c.bf16 %v2654, %v2651
      %v2762 = vpack.c.bf16 %v2662, %v2659
      %v2763 = vpack.c.bf16 %v2670, %v2667
      %v2764 = vpack.c.bf16 %v2678, %v2675
      %v2765 = vpack.c.bf16 %v2686, %v2683
      %v2766 = vpack.c.bf16 %v2694, %v2691
      %v2767 = vpack.c.bf16 %v2702, %v2699
      %v2768 = vpack.c.bf16 %v2710, %v2707
      %v2769 = vpack.c.bf16 %v2718, %v2715
      %v2770 = vpack.c.bf16 %v2726, %v2723
      %v2771 = vpack.c.bf16 %v2734, %v2731
      %v2772 = vpack.c.bf16 %v2742, %v2739
      %v2773 = vpack.c.bf16 %v2750, %v2747
      %v2774 = vpack.c.bf16 %v2758, %v2755
      %v2789 = vunpack.c.l.b16 %v2761
      %v2790 = vunpack.c.h.b16 %v2761
      %v2791 = vunpack.c.l.b16 %v2762
      %v2792 = vunpack.c.h.b16 %v2762
      %v2793 = vunpack.c.l.b16 %v2763
      %v2794 = vunpack.c.h.b16 %v2763
      %v2795 = vunpack.c.l.b16 %v2764
      %v2796 = vunpack.c.h.b16 %v2764
      %v2797 = vunpack.c.l.b16 %v2765
      %v2798 = vunpack.c.h.b16 %v2765
      %v2799 = vunpack.c.l.b16 %v2766
      %v2800 = vunpack.c.h.b16 %v2766
      %v2801 = vunpack.c.l.b16 %v2767
      %v2802 = vunpack.c.h.b16 %v2767
      %v2803 = vunpack.c.l.b16 %v2768
      %v2804 = vunpack.c.h.b16 %v2768
      %v2805 = vunpack.c.l.b16 %v2769
      %v2806 = vunpack.c.h.b16 %v2769
      %v2807 = vunpack.c.l.b16 %v2770
      %v2808 = vunpack.c.h.b16 %v2770
      %v2809 = vunpack.c.l.b16 %v2771
      %v2810 = vunpack.c.h.b16 %v2771
      %v2811 = vunpack.c.l.b16 %v2772
      %v2812 = vunpack.c.h.b16 %v2772
      %v2813 = vunpack.c.l.b16 %v2773
      %v2814 = vunpack.c.h.b16 %v2773
      %v2815 = vunpack.c.l.b16 %v2774
      %v2816 = vunpack.c.h.b16 %v2774
      %v2817 = vpack.c.b16 %v2789, %v2789
      %v2818 = vpack.c.b16 %v2790, %v2790
      %v2819 = vpack.c.b16 %v2791, %v2791
      %v2820 = vpack.c.b16 %v2792, %v2792
      %v2821 = vpack.c.b16 %v2793, %v2793
      %v2822 = vpack.c.b16 %v2794, %v2794
      %v2823 = vpack.c.b16 %v2795, %v2795
      %v2824 = vpack.c.b16 %v2796, %v2796
      %v2825 = vpack.c.b16 %v2797, %v2797
      %v2826 = vpack.c.b16 %v2798, %v2798
      %v2827 = vpack.c.b16 %v2799, %v2799
      %v2828 = vpack.c.b16 %v2800, %v2800
      %v2829 = vpack.c.b16 %v2801, %v2801
      %v2830 = vpack.c.b16 %v2802, %v2802
      %v2831 = vpack.c.b16 %v2803, %v2803
      %v2832 = vpack.c.b16 %v2804, %v2804
      %v2833 = vpack.c.b16 %v2805, %v2805
      %v2834 = vpack.c.b16 %v2806, %v2806
      %v2835 = vpack.c.b16 %v2807, %v2807
      %v2836 = vpack.c.b16 %v2808, %v2808
      %v2837 = vpack.c.b16 %v2809, %v2809
      %v2838 = vpack.c.b16 %v2810, %v2810
      %v2839 = vpack.c.b16 %v2811, %v2811
      %v2840 = vpack.c.b16 %v2812, %v2812
      %v2841 = vpack.c.b16 %v2813, %v2813
      %v2842 = vpack.c.b16 %v2814, %v2814
      %v2843 = vpack.c.b16 %v2815, %v2815
      %v2844 = vpack.c.b16 %v2816, %v2816
      %2873 = vst [vmem:[%s185] sm:$0xf] %v2817
      %2874 = vst [vmem:[%s185 + $0x4] sm:$0xf] %v2818
      %2875 = vst [vmem:[%s185 + $0x8] sm:$0xf] %v2819
      %2876 = vst [vmem:[%s185 + $0xc] sm:$0xf] %v2820
      %2877 = vst [vmem:[%s185 + $0x10] sm:$0xf] %v2821
      %2878 = vst [vmem:[%s185 + $0x14] sm:$0xf] %v2822
      %2879 = vst [vmem:[%s185 + $0x18] sm:$0xf] %v2823
      %2880 = vst [vmem:[%s185 + $0x1c] sm:$0xf] %v2824
      %2881 = vst [vmem:[%s185 + $0x20] sm:$0xf] %v2825
      %2882 = vst [vmem:[%s185 + $0x24] sm:$0xf] %v2826
      %2883 = vst [vmem:[%s185 + $0x28] sm:$0xf] %v2827
      %2884 = vst [vmem:[%s185 + $0x2c] sm:$0xf] %v2828
      %2885 = vst [vmem:[%s185 + $0x30] sm:$0xf] %v2829
      %2886 = vst [vmem:[%s185 + $0x34] sm:$0xf] %v2830
      %2887 = vst [vmem:[%s185 + $0x38] sm:$0xf] %v2831
      %2888 = vst [vmem:[%s185 + $0x3c] sm:$0xf] %v2832
      %2889 = vst [vmem:[%s185 + $0x40] sm:$0xf] %v2833
      %2890 = vst [vmem:[%s185 + $0x44] sm:$0xf] %v2834
      %2891 = vst [vmem:[%s185 + $0x48] sm:$0xf] %v2835
      %2892 = vst [vmem:[%s185 + $0x4c] sm:$0xf] %v2836
      %2893 = vst [vmem:[%s185 + $0x50] sm:$0xf] %v2837
      %2894 = vst [vmem:[%s185 + $0x54] sm:$0xf] %v2838
      %2895 = vst [vmem:[%s185 + $0x58] sm:$0xf] %v2839
      %2896 = vst [vmem:[%s185 + $0x5c] sm:$0xf] %v2840
      %2897 = vst [vmem:[%s185 + $0x60] sm:$0xf] %v2841
      %2898 = vst [vmem:[%s185 + $0x64] sm:$0xf] %v2842
      %2899 = vst [vmem:[%s185 + $0x68] sm:$0xf] %v2843
      %2900 = vst [vmem:[%s185 + $0x6c] sm:$0xf] %v2844
      %s2901 = smul.u32 28, %s18
      %p2902 = scmp.lt.s32.totalorder %s17, 1
      %s2903 = scalar_select %p2902, %s17, 1
      %p2904 = scmp.lt.s32.totalorder %s2901, 27
      %s2905 = scalar_select %p2904, %s2901, 27
      %s2906 = smul.addr %s2903, 28
      %s2907 = sadd.s32 %s2905, %s2906
      %s2908 = smul.addr %s2907, 4
      %s2909 = scalar_lea.vmem %s2, %s2908
      // Predicated region
      $region29: #{dynconv2d2_forward.1} parent=27 // pred_check
        %p2910 = pneg %p97
      $region30: #{dynconv2d2_forward.1} parent=27 // pred_check_branch
        %2912 = sbr.rel (%p2910) target = $region32
      $region31: #{dynconv2d2_forward.1} parent=27 // pred_region
        %s2913 = smul.u32 28, %s18
      $region32: #{dynconv2d2_forward.1} parent=27 // pred_fallthru
        _
    $region28: #{dynconv2d2_forward.1} parent=5 // pred_fallthru
      _
    %p2914 = scmp.le.s32.totalorder 2, %s8
    // Predicated region
    $region33: #{dynconv2d2_forward.1} parent=5 // pred_check
      %p2915 = pneg %p2914
    $region34: #{dynconv2d2_forward.1} parent=5 // pred_check_branch
      %2917 = sbr.rel (%p2915) target = $region36
    $region35: #{dynconv2d2_forward.1} parent=5 // pred_region
      %s2918 = ssub.s32 %s8, 2
      // Predicated region
      $region37: #{dynconv2d2_forward.1} parent=35 // pred_check
        %p2919 = pneg %p103
      $region38: #{dynconv2d2_forward.1} parent=35 // pred_check_branch
        %2921 = sbr.rel (%p2919) target = $region40
      $region39: #{dynconv2d2_forward.1} parent=35 // pred_region
        %s2922 = smul.u32 28, %s20
        %p2923 = scmp.lt.s32.totalorder %s19, 1
        %s2924 = scalar_select %p2923, %s19, 1
        %p2925 = scmp.lt.s32.totalorder %s2922, 27
        %s2926 = scalar_select %p2925, %s2922, 27
        %s2927 = smul.addr %s2924, 28
        %s2928 = sadd.s32 %s2926, %s2927
        %s2929 = smul.addr %s2928, 4
        %s2930 = scalar_lea.vmem %s2, %s2929
      $region40: #{dynconv2d2_forward.1} parent=35 // pred_fallthru
        _
    $region36: #{dynconv2d2_forward.1} parent=5 // pred_fallthru
      _
  $region6: #{dynconv2d2_forward.1} parent=0 // loop_footer
    %s12 = sadd.s32 1, %s8
  $region7: #{dynconv2d2_forward.1} parent=0 // loop_footer_branch
    %7 = sbr.rel target = $region3
  $region8: #{dynconv2d2_forward.1} parent=0 // loop_exit
    _

</llo_original>
